<compile_context>
chip_gen: v6e
topology: v6e:2x2x1
jax: 0.10.0
libtpu: 0.0.40
codegen_flags: <defaults>
</compile_context>

<pallas_src>
import jax
import jax.numpy as jnp
from jax.experimental import pallas as pl
from jax.experimental.pallas import tpu as pltpu

VOCAB_SIZE = 32
HIDDEN = 50
SEQ = 8
BATCH = 2

# Padded (vreg-aligned) sizes used inside the kernel.
HP = 128          # hidden padded to one 128-lane block per gate
VP = 128          # vocab padded to 128 lanes
BP = 8            # batch padded to 8 sublanes
SBP = SEQ * BP    # rows of the padded (time-major, batch-minor) slab
G4 = 4 * HP       # total width of the four gate blocks


def _sigmoid(x):
    # sigmoid(x) == 0.5*tanh(0.5*x) + 0.5 : a single native EUP tanh per gate
    # instead of a possible exp + reciprocal two-pass lowering.
    return 0.5 * jnp.tanh(0.5 * x) + 0.5


# ----------------------------------------------------------------------------
# Fused kernel: whole forward pass in one invocation.
# Gate order follows PyTorch: [i, f, g, o], each gate in its own 128-lane block.
# ----------------------------------------------------------------------------
def _net_fused_kernel(x_ref, w_ih_ref, b_ref, w_rec_ref, out_ref, xg_scr):
    # Input projections (+ combined bias) for every time step in one MXU pass:
    # (S*BP, VP) @ (VP, 4*HP).  Bias added exactly in f32 (kept out of the
    # matmul so it is not bf16-rounded by the MXU input pass).
    xg_scr[...] = (
        jnp.dot(x_ref[...], w_ih_ref[...], preferred_element_type=jnp.float32)
        + b_ref[...]
    )

    # Fused recurrent RHS: [W_hh | W_out] -> (HP, 4*HP + VP).  Loop invariant.
    # TODO(synk): if the bundle dump shows Mosaic re-pushing this RHS every
    # step, holding it MXU-weight-stationary via pltpu.matmul_push_rhs /
    # matmul_acc_lhs / matmul_pop would shave the per-step weight-push
    # latency; skipped here because the staging layout is generation-specific.
    w_rec = w_rec_ref[...]

    def cell(gates, c):
        i_g = _sigmoid(gates[:, 0 * HP:1 * HP])
        f_g = _sigmoid(gates[:, 1 * HP:2 * HP])
        g_g = jnp.tanh(gates[:, 2 * HP:3 * HP])
        o_g = _sigmoid(gates[:, 3 * HP:4 * HP])
        c_new = f_g * c + i_g * g_g          # padded lanes: 0.5*0 + 0.5*0 = 0
        h_new = o_g * jnp.tanh(c_new)        # padded lanes: 0.5*0 = 0
        return h_new, c_new

    # t = 0: h = c = 0, so the recurrent matmul contributes nothing -> skip it.
    h, c = cell(xg_scr[pl.ds(0, BP), :], jnp.zeros((BP, HP), jnp.float32))

    # Fully unrolled recurrence with static, sublane-aligned row offsets.
    # Each step: one (8,128)@(128,640) matmul yields gates for step t in the
    # first 512 lanes and the logits of step t-1's h in the last 128 lanes.
    for t in range(1, SEQ):
        hw = jnp.dot(h, w_rec, preferred_element_type=jnp.float32)  # (BP, 4HP+VP)
        out_ref[pl.ds((t - 1) * BP, BP), :] = hw[:, G4:]            # logits h_{t-1}
        h, c = cell(xg_scr[pl.ds(t * BP, BP), :] + hw[:, :G4], c)

    # Logits for the final hidden state: one tiny (8,128)@(128,128) matmul.
    out_ref[pl.ds((SEQ - 1) * BP, BP), :] = jnp.dot(
        h, w_rec[:, G4:], preferred_element_type=jnp.float32
    )


def net_pallas(x_flat, w_ih_pad, b_pad, w_rec_pad):
    """x_flat: (S*BP, VP) padded, time-major / batch-minor."""
    # No grid: single invocation, whole operands resident in VMEM (< 1 MiB
    # total), no pipelining / double-buffering machinery for a 1-step grid.
    vmem = pl.BlockSpec(memory_space=pltpu.MemorySpace.VMEM)
    return pl.pallas_call(
        _net_fused_kernel,
        out_shape=jax.ShapeDtypeStruct((SBP, VP), jnp.float32),
        in_specs=[vmem, vmem, vmem, vmem],
        out_specs=vmem,
        scratch_shapes=[pltpu.VMEM((SBP, G4), jnp.float32)],  # precomputed x-gates
    )(x_flat, w_ih_pad, b_pad, w_rec_pad)


# ----------------------------------------------------------------------------
# Full Net forward
# ----------------------------------------------------------------------------
@jax.jit
def net_forward(x, params):
    S, B, V = x.shape
    # Pad batch -> 8 sublanes, vocab -> 128 lanes; flatten time-major.
    x_pad = jnp.pad(x, ((0, 0), (0, BP - B), (0, VP - V)))
    x_flat = x_pad.reshape(S * BP, VP)
    out_pad = net_pallas(
        x_flat,
        params["w_ih_pad"],
        params["b_pad"],
        params["w_rec_pad"],
    )
    # Drop padded batch rows / vocab lanes; matches x.view(-1, H) @ W_out.T.
    return out_pad.reshape(S, BP, VP)[:, :B, :V].reshape(S * B, V)


def init_params(key):
    """Deterministic init, PyTorch-style U(-1/sqrt(H), 1/sqrt(H))."""
    k = 1.0 / jnp.sqrt(jnp.float32(HIDDEN))
    keys = jax.random.split(key, 5)
    w_ih = jax.random.uniform(keys[0], (4 * HIDDEN, VOCAB_SIZE), jnp.float32, -k, k)
    w_hh = jax.random.uniform(keys[1], (4 * HIDDEN, HIDDEN), jnp.float32, -k, k)
    b_ih = jax.random.uniform(keys[2], (4 * HIDDEN,), jnp.float32, -k, k)
    b_hh = jax.random.uniform(keys[3], (4 * HIDDEN,), jnp.float32, -k, k)
    w_out = jax.random.uniform(keys[4], (VOCAB_SIZE, HIDDEN), jnp.float32, -k, k)

    def pad_gate_cols(w_t):
        # w_t: (in_dim, 4*HIDDEN), PyTorch gate order [i, f, g, o] along cols.
        # -> (in_dim, 4*HP) with each gate zero-padded to its own 128-lane block.
        in_dim = w_t.shape[0]
        w4 = w_t.reshape(in_dim, 4, HIDDEN)
        w4 = jnp.pad(w4, ((0, 0), (0, 0), (0, HP - HIDDEN)))
        return w4.reshape(in_dim, 4 * HP)

    w_ih_pad = jnp.pad(pad_gate_cols(w_ih.T),
                       ((0, VP - VOCAB_SIZE), (0, 0)))             # (VP, 4*HP)
    w_hh_pad = jnp.pad(pad_gate_cols(w_hh.T),
                       ((0, HP - HIDDEN), (0, 0)))                 # (HP, 4*HP)
    b_pad = pad_gate_cols((b_ih + b_hh)[None, :])                  # (1, 4*HP)
    w_out_pad = jnp.pad(w_out.T,
                        ((0, HP - HIDDEN), (0, VP - VOCAB_SIZE)))  # (HP, VP)
    # Fused recurrent RHS: [W_hh | W_out] -> (HP, 4*HP + VP).
    w_rec_pad = jnp.concatenate([w_hh_pad, w_out_pad], axis=1)     # (HP, 640)

    params = {
        "w_ih_pad": w_ih_pad,
        "b_pad": b_pad,
        "w_rec_pad": w_rec_pad,
    }
    raw = (w_ih, w_hh, b_ih, b_hh, w_out)
    return params, raw


def reference_forward(x, raw):
    """Pure-JAX reference reproducing PyTorch LSTM + Linear(bias=False)."""
    w_ih, w_hh, b_ih, b_hh, w_out = raw
    H = HIDDEN

    def step(carry, x_t):
        h, c = carry
        gates = x_t @ w_ih.T + b_ih + h @ w_hh.T + b_hh
        i = jax.nn.sigmoid(gates[:, 0 * H:1 * H])
        f = jax.nn.sigmoid(gates[:, 1 * H:2 * H])
        g = jnp.tanh(gates[:, 2 * H:3 * H])
        o = jax.nn.sigmoid(gates[:, 3 * H:4 * H])
        c = f * c + i * g
        h = o * jnp.tanh(c)
        return (h, c), h

    h0 = jnp.zeros((x.shape[1], H), jnp.float32)
    c0 = jnp.zeros((x.shape[1], H), jnp.float32)
    _, h_all = jax.lax.scan(step, (h0, c0), x)
    return h_all.reshape(-1, H) @ w_out.T


if __name__ == "__main__":
    key = jax.random.PRNGKey(0)
    pkey, xkey = jax.random.split(key)
    params, raw = init_params(pkey)

    x = jax.random.normal(xkey, (SEQ, BATCH, VOCAB_SIZE), jnp.float32)

    out = net_forward(x, params)
    out = jax.block_until_ready(out)

    ref = reference_forward(x, raw)
    assert out.shape == (SEQ * BATCH, VOCAB_SIZE), out.shape
    assert jnp.allclose(out, ref, atol=1e-4, rtol=1e-4), (
        float(jnp.max(jnp.abs(out - ref)))
    )

    print("KERNEL_OK")
</pallas_src>

<mosaic_0001>
module attributes {stable_mosaic.version = 11 : i64} {
  func.func @_net_fused_kernel(%arg0: memref<64x128xf32, #tpu.memory_space<vmem>>, %arg1: memref<128x512xf32, #tpu.memory_space<vmem>>, %arg2: memref<1x512xf32, #tpu.memory_space<vmem>>, %arg3: memref<128x640xf32, #tpu.memory_space<vmem>>, %arg4: memref<64x128xf32, #tpu.memory_space<vmem>>, %arg5: memref<64x512xf32, #tpu.memory_space<vmem>>) attributes {dimension_semantics = [], scalar_prefetch = 0 : i64, scratch_operands = 1 : i64, tpu.core_type = #tpu.core_type<tc>} {
    %c0 = arith.constant 0 : index
    %c0_0 = arith.constant 0 : index
    %0 = vector.load %arg0[%c0, %c0_0] : memref<64x128xf32, #tpu.memory_space<vmem>>, vector<64x128xf32>
    %c0_1 = arith.constant 0 : index
    %c0_2 = arith.constant 0 : index
    %1 = vector.load %arg1[%c0_1, %c0_2] : memref<128x512xf32, #tpu.memory_space<vmem>>, vector<128x512xf32>
    %cst = arith.constant dense<0.000000e+00> : vector<64x512xf32>
    %2 = tpu.matmul %0, %1, %cst {dimension_numbers = #tpu.dot_dimension_numbers<[1], [0], [0], [1], [0, 0, 1, 1], [], []>} : vector<64x128xf32>, vector<128x512xf32>, vector<64x512xf32> -> vector<64x512xf32>
    %c0_3 = arith.constant 0 : index
    %c0_4 = arith.constant 0 : index
    %3 = vector.load %arg2[%c0_3, %c0_4] : memref<1x512xf32, #tpu.memory_space<vmem>>, vector<1x512xf32>
    %4 = vector.broadcast %3 : vector<1x512xf32> to vector<64x512xf32>
    %5 = arith.addf %2, %4 : vector<64x512xf32>
    %c0_5 = arith.constant 0 : index
    %c0_6 = arith.constant 0 : index
    %6 = vector.load %arg5[%c0_5, %c0_6] : memref<64x512xf32, #tpu.memory_space<vmem>>, vector<64x512xf32>
    tpu.vector_store %arg5[%c0_5, %c0_6], %5 {strides = array<i32>} : memref<64x512xf32, #tpu.memory_space<vmem>>, vector<64x512xf32>,
    %c0_7 = arith.constant 0 : index
    %c0_8 = arith.constant 0 : index
    %7 = vector.load %arg3[%c0_7, %c0_8] : memref<128x640xf32, #tpu.memory_space<vmem>>, vector<128x640xf32>
    %c0_9 = arith.constant 0 : index
    %c0_10 = arith.constant 0 : index
    %8 = vector.load %arg5[%c0_9, %c0_10] : memref<64x512xf32, #tpu.memory_space<vmem>>, vector<8x512xf32>
    %cst_11 = arith.constant 0.000000e+00 : f32
    %9 = vector.broadcast %cst_11 : f32 to vector<8x128xf32>
    %10 = vector.extract_strided_slice %8 {offsets = [0, 0], sizes = [8, 128], strides = [1, 1]} : vector<8x512xf32> to vector<8x128xf32>
    %cst_12 = arith.constant 5.000000e-01 : f32
    %11 = vector.broadcast %cst_12 : f32 to vector<8x128xf32>
    %12 = arith.mulf %11, %10 : vector<8x128xf32>
    %13 = math.tanh %12 : vector<8x128xf32>
    %cst_13 = arith.constant 5.000000e-01 : f32
    %14 = vector.broadcast %cst_13 : f32 to vector<8x128xf32>
    %15 = arith.mulf %14, %13 : vector<8x128xf32>
    %cst_14 = arith.constant 5.000000e-01 : f32
    %16 = vector.broadcast %cst_14 : f32 to vector<8x128xf32>
    %17 = arith.addf %15, %16 : vector<8x128xf32>
    %18 = vector.extract_strided_slice %8 {offsets = [0, 128], sizes = [8, 128], strides = [1, 1]} : vector<8x512xf32> to vector<8x128xf32>
    %cst_15 = arith.constant 5.000000e-01 : f32
    %19 = vector.broadcast %cst_15 : f32 to vector<8x128xf32>
    %20 = arith.mulf %19, %18 : vector<8x128xf32>
    %21 = math.tanh %20 : vector<8x128xf32>
    %cst_16 = arith.constant 5.000000e-01 : f32
    %22 = vector.broadcast %cst_16 : f32 to vector<8x128xf32>
    %23 = arith.mulf %22, %21 : vector<8x128xf32>
    %cst_17 = arith.constant 5.000000e-01 : f32
    %24 = vector.broadcast %cst_17 : f32 to vector<8x128xf32>
    %25 = arith.addf %23, %24 : vector<8x128xf32>
    %26 = vector.extract_strided_slice %8 {offsets = [0, 256], sizes = [8, 128], strides = [1, 1]} : vector<8x512xf32> to vector<8x128xf32>
    %27 = math.tanh %26 : vector<8x128xf32>
    %28 = vector.extract_strided_slice %8 {offsets = [0, 384], sizes = [8, 128], strides = [1, 1]} : vector<8x512xf32> to vector<8x128xf32>
    %cst_18 = arith.constant 5.000000e-01 : f32
    %29 = vector.broadcast %cst_18 : f32 to vector<8x128xf32>
    %30 = arith.mulf %29, %28 : vector<8x128xf32>
    %31 = math.tanh %30 : vector<8x128xf32>
    %cst_19 = arith.constant 5.000000e-01 : f32
    %32 = vector.broadcast %cst_19 : f32 to vector<8x128xf32>
    %33 = arith.mulf %32, %31 : vector<8x128xf32>
    %cst_20 = arith.constant 5.000000e-01 : f32
    %34 = vector.broadcast %cst_20 : f32 to vector<8x128xf32>
    %35 = arith.addf %33, %34 : vector<8x128xf32>
    %36 = arith.mulf %25, %9 : vector<8x128xf32>
    %37 = arith.mulf %17, %27 : vector<8x128xf32>
    %38 = arith.addf %36, %37 : vector<8x128xf32>
    %39 = math.tanh %38 : vector<8x128xf32>
    %40 = arith.mulf %35, %39 : vector<8x128xf32>
    %cst_21 = arith.constant dense<0.000000e+00> : vector<8x640xf32>
    %41 = tpu.matmul %40, %7, %cst_21 {dimension_numbers = #tpu.dot_dimension_numbers<[1], [0], [0], [1], [0, 0, 1, 1], [], []>} : vector<8x128xf32>, vector<128x640xf32>, vector<8x640xf32> -> vector<8x640xf32>
    %42 = vector.extract_strided_slice %41 {offsets = [0, 512], sizes = [8, 128], strides = [1, 1]} : vector<8x640xf32> to vector<8x128xf32>
    %c0_22 = arith.constant 0 : index
    %c0_23 = arith.constant 0 : index
    %43 = vector.load %arg4[%c0_22, %c0_23] : memref<64x128xf32, #tpu.memory_space<vmem>>, vector<8x128xf32>
    tpu.vector_store %arg4[%c0_22, %c0_23], %42 {strides = array<i32>} : memref<64x128xf32, #tpu.memory_space<vmem>>, vector<8x128xf32>,
    %c8 = arith.constant 8 : index
    %c0_24 = arith.constant 0 : index
    %44 = vector.load %arg5[%c8, %c0_24] : memref<64x512xf32, #tpu.memory_space<vmem>>, vector<8x512xf32>
    %45 = vector.extract_strided_slice %41 {offsets = [0, 0], sizes = [8, 512], strides = [1, 1]} : vector<8x640xf32> to vector<8x512xf32>
    %46 = arith.addf %44, %45 : vector<8x512xf32>
    %47 = vector.extract_strided_slice %46 {offsets = [0, 0], sizes = [8, 128], strides = [1, 1]} : vector<8x512xf32> to vector<8x128xf32>
    %cst_25 = arith.constant 5.000000e-01 : f32
    %48 = vector.broadcast %cst_25 : f32 to vector<8x128xf32>
    %49 = arith.mulf %48, %47 : vector<8x128xf32>
    %50 = math.tanh %49 : vector<8x128xf32>
    %cst_26 = arith.constant 5.000000e-01 : f32
    %51 = vector.broadcast %cst_26 : f32 to vector<8x128xf32>
    %52 = arith.mulf %51, %50 : vector<8x128xf32>
    %cst_27 = arith.constant 5.000000e-01 : f32
    %53 = vector.broadcast %cst_27 : f32 to vector<8x128xf32>
    %54 = arith.addf %52, %53 : vector<8x128xf32>
    %55 = vector.extract_strided_slice %46 {offsets = [0, 128], sizes = [8, 128], strides = [1, 1]} : vector<8x512xf32> to vector<8x128xf32>
    %cst_28 = arith.constant 5.000000e-01 : f32
    %56 = vector.broadcast %cst_28 : f32 to vector<8x128xf32>
    %57 = arith.mulf %56, %55 : vector<8x128xf32>
    %58 = math.tanh %57 : vector<8x128xf32>
    %cst_29 = arith.constant 5.000000e-01 : f32
    %59 = vector.broadcast %cst_29 : f32 to vector<8x128xf32>
    %60 = arith.mulf %59, %58 : vector<8x128xf32>
    %cst_30 = arith.constant 5.000000e-01 : f32
    %61 = vector.broadcast %cst_30 : f32 to vector<8x128xf32>
    %62 = arith.addf %60, %61 : vector<8x128xf32>
    %63 = vector.extract_strided_slice %46 {offsets = [0, 256], sizes = [8, 128], strides = [1, 1]} : vector<8x512xf32> to vector<8x128xf32>
    %64 = math.tanh %63 : vector<8x128xf32>
    %65 = vector.extract_strided_slice %46 {offsets = [0, 384], sizes = [8, 128], strides = [1, 1]} : vector<8x512xf32> to vector<8x128xf32>
    %cst_31 = arith.constant 5.000000e-01 : f32
    %66 = vector.broadcast %cst_31 : f32 to vector<8x128xf32>
    %67 = arith.mulf %66, %65 : vector<8x128xf32>
    %68 = math.tanh %67 : vector<8x128xf32>
    %cst_32 = arith.constant 5.000000e-01 : f32
    %69 = vector.broadcast %cst_32 : f32 to vector<8x128xf32>
    %70 = arith.mulf %69, %68 : vector<8x128xf32>
    %cst_33 = arith.constant 5.000000e-01 : f32
    %71 = vector.broadcast %cst_33 : f32 to vector<8x128xf32>
    %72 = arith.addf %70, %71 : vector<8x128xf32>
    %73 = arith.mulf %62, %38 : vector<8x128xf32>
    %74 = arith.mulf %54, %64 : vector<8x128xf32>
    %75 = arith.addf %73, %74 : vector<8x128xf32>
    %76 = math.tanh %75 : vector<8x128xf32>
    %77 = arith.mulf %72, %76 : vector<8x128xf32>
    %cst_34 = arith.constant dense<0.000000e+00> : vector<8x640xf32>
    %78 = tpu.matmul %77, %7, %cst_34 {dimension_numbers = #tpu.dot_dimension_numbers<[1], [0], [0], [1], [0, 0, 1, 1], [], []>} : vector<8x128xf32>, vector<128x640xf32>, vector<8x640xf32> -> vector<8x640xf32>
    %79 = vector.extract_strided_slice %78 {offsets = [0, 512], sizes = [8, 128], strides = [1, 1]} : vector<8x640xf32> to vector<8x128xf32>
    %c8_35 = arith.constant 8 : index
    %c0_36 = arith.constant 0 : index
    %80 = vector.load %arg4[%c8_35, %c0_36] : memref<64x128xf32, #tpu.memory_space<vmem>>, vector<8x128xf32>
    tpu.vector_store %arg4[%c8_35, %c0_36], %79 {strides = array<i32>} : memref<64x128xf32, #tpu.memory_space<vmem>>, vector<8x128xf32>,
    %c16 = arith.constant 16 : index
    %c0_37 = arith.constant 0 : index
    %81 = vector.load %arg5[%c16, %c0_37] : memref<64x512xf32, #tpu.memory_space<vmem>>, vector<8x512xf32>
    %82 = vector.extract_strided_slice %78 {offsets = [0, 0], sizes = [8, 512], strides = [1, 1]} : vector<8x640xf32> to vector<8x512xf32>
    %83 = arith.addf %81, %82 : vector<8x512xf32>
    %84 = vector.extract_strided_slice %83 {offsets = [0, 0], sizes = [8, 128], strides = [1, 1]} : vector<8x512xf32> to vector<8x128xf32>
    %cst_38 = arith.constant 5.000000e-01 : f32
    %85 = vector.broadcast %cst_38 : f32 to vector<8x128xf32>
    %86 = arith.mulf %85, %84 : vector<8x128xf32>
    %87 = math.tanh %86 : vector<8x128xf32>
    %cst_39 = arith.constant 5.000000e-01 : f32
    %88 = vector.broadcast %cst_39 : f32 to vector<8x128xf32>
    %89 = arith.mulf %88, %87 : vector<8x128xf32>
    %cst_40 = arith.constant 5.000000e-01 : f32
    %90 = vector.broadcast %cst_40 : f32 to vector<8x128xf32>
    %91 = arith.addf %89, %90 : vector<8x128xf32>
    %92 = vector.extract_strided_slice %83 {offsets = [0, 128], sizes = [8, 128], strides = [1, 1]} : vector<8x512xf32> to vector<8x128xf32>
    %cst_41 = arith.constant 5.000000e-01 : f32
    %93 = vector.broadcast %cst_41 : f32 to vector<8x128xf32>
    %94 = arith.mulf %93, %92 : vector<8x128xf32>
    %95 = math.tanh %94 : vector<8x128xf32>
    %cst_42 = arith.constant 5.000000e-01 : f32
    %96 = vector.broadcast %cst_42 : f32 to vector<8x128xf32>
    %97 = arith.mulf %96, %95 : vector<8x128xf32>
    %cst_43 = arith.constant 5.000000e-01 : f32
    %98 = vector.broadcast %cst_43 : f32 to vector<8x128xf32>
    %99 = arith.addf %97, %98 : vector<8x128xf32>
    %100 = vector.extract_strided_slice %83 {offsets = [0, 256], sizes = [8, 128], strides = [1, 1]} : vector<8x512xf32> to vector<8x128xf32>
    %101 = math.tanh %100 : vector<8x128xf32>
    %102 = vector.extract_strided_slice %83 {offsets = [0, 384], sizes = [8, 128], strides = [1, 1]} : vector<8x512xf32> to vector<8x128xf32>
    %cst_44 = arith.constant 5.000000e-01 : f32
    %103 = vector.broadcast %cst_44 : f32 to vector<8x128xf32>
    %104 = arith.mulf %103, %102 : vector<8x128xf32>
    %105 = math.tanh %104 : vector<8x128xf32>
    %cst_45 = arith.constant 5.000000e-01 : f32
    %106 = vector.broadcast %cst_45 : f32 to vector<8x128xf32>
    %107 = arith.mulf %106, %105 : vector<8x128xf32>
    %cst_46 = arith.constant 5.000000e-01 : f32
    %108 = vector.broadcast %cst_46 : f32 to vector<8x128xf32>
    %109 = arith.addf %107, %108 : vector<8x128xf32>
    %110 = arith.mulf %99, %75 : vector<8x128xf32>
    %111 = arith.mulf %91, %101 : vector<8x128xf32>
    %112 = arith.addf %110, %111 : vector<8x128xf32>
    %113 = math.tanh %112 : vector<8x128xf32>
    %114 = arith.mulf %109, %113 : vector<8x128xf32>
    %cst_47 = arith.constant dense<0.000000e+00> : vector<8x640xf32>
    %115 = tpu.matmul %114, %7, %cst_47 {dimension_numbers = #tpu.dot_dimension_numbers<[1], [0], [0], [1], [0, 0, 1, 1], [], []>} : vector<8x128xf32>, vector<128x640xf32>, vector<8x640xf32> -> vector<8x640xf32>
    %116 = vector.extract_strided_slice %115 {offsets = [0, 512], sizes = [8, 128], strides = [1, 1]} : vector<8x640xf32> to vector<8x128xf32>
    %c16_48 = arith.constant 16 : index
    %c0_49 = arith.constant 0 : index
    %117 = vector.load %arg4[%c16_48, %c0_49] : memref<64x128xf32, #tpu.memory_space<vmem>>, vector<8x128xf32>
    tpu.vector_store %arg4[%c16_48, %c0_49], %116 {strides = array<i32>} : memref<64x128xf32, #tpu.memory_space<vmem>>, vector<8x128xf32>,
    %c24 = arith.constant 24 : index
    %c0_50 = arith.constant 0 : index
    %118 = vector.load %arg5[%c24, %c0_50] : memref<64x512xf32, #tpu.memory_space<vmem>>, vector<8x512xf32>
    %119 = vector.extract_strided_slice %115 {offsets = [0, 0], sizes = [8, 512], strides = [1, 1]} : vector<8x640xf32> to vector<8x512xf32>
    %120 = arith.addf %118, %119 : vector<8x512xf32>
    %121 = vector.extract_strided_slice %120 {offsets = [0, 0], sizes = [8, 128], strides = [1, 1]} : vector<8x512xf32> to vector<8x128xf32>
    %cst_51 = arith.constant 5.000000e-01 : f32
    %122 = vector.broadcast %cst_51 : f32 to vector<8x128xf32>
    %123 = arith.mulf %122, %121 : vector<8x128xf32>
    %124 = math.tanh %123 : vector<8x128xf32>
    %cst_52 = arith.constant 5.000000e-01 : f32
    %125 = vector.broadcast %cst_52 : f32 to vector<8x128xf32>
    %126 = arith.mulf %125, %124 : vector<8x128xf32>
    %cst_53 = arith.constant 5.000000e-01 : f32
    %127 = vector.broadcast %cst_53 : f32 to vector<8x128xf32>
    %128 = arith.addf %126, %127 : vector<8x128xf32>
    %129 = vector.extract_strided_slice %120 {offsets = [0, 128], sizes = [8, 128], strides = [1, 1]} : vector<8x512xf32> to vector<8x128xf32>
    %cst_54 = arith.constant 5.000000e-01 : f32
    %130 = vector.broadcast %cst_54 : f32 to vector<8x128xf32>
    %131 = arith.mulf %130, %129 : vector<8x128xf32>
    %132 = math.tanh %131 : vector<8x128xf32>
    %cst_55 = arith.constant 5.000000e-01 : f32
    %133 = vector.broadcast %cst_55 : f32 to vector<8x128xf32>
    %134 = arith.mulf %133, %132 : vector<8x128xf32>
    %cst_56 = arith.constant 5.000000e-01 : f32
    %135 = vector.broadcast %cst_56 : f32 to vector<8x128xf32>
    %136 = arith.addf %134, %135 : vector<8x128xf32>
    %137 = vector.extract_strided_slice %120 {offsets = [0, 256], sizes = [8, 128], strides = [1, 1]} : vector<8x512xf32> to vector<8x128xf32>
    %138 = math.tanh %137 : vector<8x128xf32>
    %139 = vector.extract_strided_slice %120 {offsets = [0, 384], sizes = [8, 128], strides = [1, 1]} : vector<8x512xf32> to vector<8x128xf32>
    %cst_57 = arith.constant 5.000000e-01 : f32
    %140 = vector.broadcast %cst_57 : f32 to vector<8x128xf32>
    %141 = arith.mulf %140, %139 : vector<8x128xf32>
    %142 = math.tanh %141 : vector<8x128xf32>
    %cst_58 = arith.constant 5.000000e-01 : f32
    %143 = vector.broadcast %cst_58 : f32 to vector<8x128xf32>
    %144 = arith.mulf %143, %142 : vector<8x128xf32>
    %cst_59 = arith.constant 5.000000e-01 : f32
    %145 = vector.broadcast %cst_59 : f32 to vector<8x128xf32>
    %146 = arith.addf %144, %145 : vector<8x128xf32>
    %147 = arith.mulf %136, %112 : vector<8x128xf32>
    %148 = arith.mulf %128, %138 : vector<8x128xf32>
    %149 = arith.addf %147, %148 : vector<8x128xf32>
    %150 = math.tanh %149 : vector<8x128xf32>
    %151 = arith.mulf %146, %150 : vector<8x128xf32>
    %cst_60 = arith.constant dense<0.000000e+00> : vector<8x640xf32>
    %152 = tpu.matmul %151, %7, %cst_60 {dimension_numbers = #tpu.dot_dimension_numbers<[1], [0], [0], [1], [0, 0, 1, 1], [], []>} : vector<8x128xf32>, vector<128x640xf32>, vector<8x640xf32> -> vector<8x640xf32>
    %153 = vector.extract_strided_slice %152 {offsets = [0, 512], sizes = [8, 128], strides = [1, 1]} : vector<8x640xf32> to vector<8x128xf32>
    %c24_61 = arith.constant 24 : index
    %c0_62 = arith.constant 0 : index
    %154 = vector.load %arg4[%c24_61, %c0_62] : memref<64x128xf32, #tpu.memory_space<vmem>>, vector<8x128xf32>
    tpu.vector_store %arg4[%c24_61, %c0_62], %153 {strides = array<i32>} : memref<64x128xf32, #tpu.memory_space<vmem>>, vector<8x128xf32>,
    %c32 = arith.constant 32 : index
    %c0_63 = arith.constant 0 : index
    %155 = vector.load %arg5[%c32, %c0_63] : memref<64x512xf32, #tpu.memory_space<vmem>>, vector<8x512xf32>
    %156 = vector.extract_strided_slice %152 {offsets = [0, 0], sizes = [8, 512], strides = [1, 1]} : vector<8x640xf32> to vector<8x512xf32>
    %157 = arith.addf %155, %156 : vector<8x512xf32>
    %158 = vector.extract_strided_slice %157 {offsets = [0, 0], sizes = [8, 128], strides = [1, 1]} : vector<8x512xf32> to vector<8x128xf32>
    %cst_64 = arith.constant 5.000000e-01 : f32
    %159 = vector.broadcast %cst_64 : f32 to vector<8x128xf32>
    %160 = arith.mulf %159, %158 : vector<8x128xf32>
    %161 = math.tanh %160 : vector<8x128xf32>
    %cst_65 = arith.constant 5.000000e-01 : f32
    %162 = vector.broadcast %cst_65 : f32 to vector<8x128xf32>
    %163 = arith.mulf %162, %161 : vector<8x128xf32>
    %cst_66 = arith.constant 5.000000e-01 : f32
    %164 = vector.broadcast %cst_66 : f32 to vector<8x128xf32>
    %165 = arith.addf %163, %164 : vector<8x128xf32>
    %166 = vector.extract_strided_slice %157 {offsets = [0, 128], sizes = [8, 128], strides = [1, 1]} : vector<8x512xf32> to vector<8x128xf32>
    %cst_67 = arith.constant 5.000000e-01 : f32
    %167 = vector.broadcast %cst_67 : f32 to vector<8x128xf32>
    %168 = arith.mulf %167, %166 : vector<8x128xf32>
    %169 = math.tanh %168 : vector<8x128xf32>
    %cst_68 = arith.constant 5.000000e-01 : f32
    %170 = vector.broadcast %cst_68 : f32 to vector<8x128xf32>
    %171 = arith.mulf %170, %169 : vector<8x128xf32>
    %cst_69 = arith.constant 5.000000e-01 : f32
    %172 = vector.broadcast %cst_69 : f32 to vector<8x128xf32>
    %173 = arith.addf %171, %172 : vector<8x128xf32>
    %174 = vector.extract_strided_slice %157 {offsets = [0, 256], sizes = [8, 128], strides = [1, 1]} : vector<8x512xf32> to vector<8x128xf32>
    %175 = math.tanh %174 : vector<8x128xf32>
    %176 = vector.extract_strided_slice %157 {offsets = [0, 384], sizes = [8, 128], strides = [1, 1]} : vector<8x512xf32> to vector<8x128xf32>
    %cst_70 = arith.constant 5.000000e-01 : f32
    %177 = vector.broadcast %cst_70 : f32 to vector<8x128xf32>
    %178 = arith.mulf %177, %176 : vector<8x128xf32>
    %179 = math.tanh %178 : vector<8x128xf32>
    %cst_71 = arith.constant 5.000000e-01 : f32
    %180 = vector.broadcast %cst_71 : f32 to vector<8x128xf32>
    %181 = arith.mulf %180, %179 : vector<8x128xf32>
    %cst_72 = arith.constant 5.000000e-01 : f32
    %182 = vector.broadcast %cst_72 : f32 to vector<8x128xf32>
    %183 = arith.addf %181, %182 : vector<8x128xf32>
    %184 = arith.mulf %173, %149 : vector<8x128xf32>
    %185 = arith.mulf %165, %175 : vector<8x128xf32>
    %186 = arith.addf %184, %185 : vector<8x128xf32>
    %187 = math.tanh %186 : vector<8x128xf32>
    %188 = arith.mulf %183, %187 : vector<8x128xf32>
    %cst_73 = arith.constant dense<0.000000e+00> : vector<8x640xf32>
    %189 = tpu.matmul %188, %7, %cst_73 {dimension_numbers = #tpu.dot_dimension_numbers<[1], [0], [0], [1], [0, 0, 1, 1], [], []>} : vector<8x128xf32>, vector<128x640xf32>, vector<8x640xf32> -> vector<8x640xf32>
    %190 = vector.extract_strided_slice %189 {offsets = [0, 512], sizes = [8, 128], strides = [1, 1]} : vector<8x640xf32> to vector<8x128xf32>
    %c32_74 = arith.constant 32 : index
    %c0_75 = arith.constant 0 : index
    %191 = vector.load %arg4[%c32_74, %c0_75] : memref<64x128xf32, #tpu.memory_space<vmem>>, vector<8x128xf32>
    tpu.vector_store %arg4[%c32_74, %c0_75], %190 {strides = array<i32>} : memref<64x128xf32, #tpu.memory_space<vmem>>, vector<8x128xf32>,
    %c40 = arith.constant 40 : index
    %c0_76 = arith.constant 0 : index
    %192 = vector.load %arg5[%c40, %c0_76] : memref<64x512xf32, #tpu.memory_space<vmem>>, vector<8x512xf32>
    %193 = vector.extract_strided_slice %189 {offsets = [0, 0], sizes = [8, 512], strides = [1, 1]} : vector<8x640xf32> to vector<8x512xf32>
    %194 = arith.addf %192, %193 : vector<8x512xf32>
    %195 = vector.extract_strided_slice %194 {offsets = [0, 0], sizes = [8, 128], strides = [1, 1]} : vector<8x512xf32> to vector<8x128xf32>
    %cst_77 = arith.constant 5.000000e-01 : f32
    %196 = vector.broadcast %cst_77 : f32 to vector<8x128xf32>
    %197 = arith.mulf %196, %195 : vector<8x128xf32>
    %198 = math.tanh %197 : vector<8x128xf32>
    %cst_78 = arith.constant 5.000000e-01 : f32
    %199 = vector.broadcast %cst_78 : f32 to vector<8x128xf32>
    %200 = arith.mulf %199, %198 : vector<8x128xf32>
    %cst_79 = arith.constant 5.000000e-01 : f32
    %201 = vector.broadcast %cst_79 : f32 to vector<8x128xf32>
    %202 = arith.addf %200, %201 : vector<8x128xf32>
    %203 = vector.extract_strided_slice %194 {offsets = [0, 128], sizes = [8, 128], strides = [1, 1]} : vector<8x512xf32> to vector<8x128xf32>
    %cst_80 = arith.constant 5.000000e-01 : f32
    %204 = vector.broadcast %cst_80 : f32 to vector<8x128xf32>
    %205 = arith.mulf %204, %203 : vector<8x128xf32>
    %206 = math.tanh %205 : vector<8x128xf32>
    %cst_81 = arith.constant 5.000000e-01 : f32
    %207 = vector.broadcast %cst_81 : f32 to vector<8x128xf32>
    %208 = arith.mulf %207, %206 : vector<8x128xf32>
    %cst_82 = arith.constant 5.000000e-01 : f32
    %209 = vector.broadcast %cst_82 : f32 to vector<8x128xf32>
    %210 = arith.addf %208, %209 : vector<8x128xf32>
    %211 = vector.extract_strided_slice %194 {offsets = [0, 256], sizes = [8, 128], strides = [1, 1]} : vector<8x512xf32> to vector<8x128xf32>
    %212 = math.tanh %211 : vector<8x128xf32>
    %213 = vector.extract_strided_slice %194 {offsets = [0, 384], sizes = [8, 128], strides = [1, 1]} : vector<8x512xf32> to vector<8x128xf32>
    %cst_83 = arith.constant 5.000000e-01 : f32
    %214 = vector.broadcast %cst_83 : f32 to vector<8x128xf32>
    %215 = arith.mulf %214, %213 : vector<8x128xf32>
    %216 = math.tanh %215 : vector<8x128xf32>
    %cst_84 = arith.constant 5.000000e-01 : f32
    %217 = vector.broadcast %cst_84 : f32 to vector<8x128xf32>
    %218 = arith.mulf %217, %216 : vector<8x128xf32>
    %cst_85 = arith.constant 5.000000e-01 : f32
    %219 = vector.broadcast %cst_85 : f32 to vector<8x128xf32>
    %220 = arith.addf %218, %219 : vector<8x128xf32>
    %221 = arith.mulf %210, %186 : vector<8x128xf32>
    %222 = arith.mulf %202, %212 : vector<8x128xf32>
    %223 = arith.addf %221, %222 : vector<8x128xf32>
    %224 = math.tanh %223 : vector<8x128xf32>
    %225 = arith.mulf %220, %224 : vector<8x128xf32>
    %cst_86 = arith.constant dense<0.000000e+00> : vector<8x640xf32>
    %226 = tpu.matmul %225, %7, %cst_86 {dimension_numbers = #tpu.dot_dimension_numbers<[1], [0], [0], [1], [0, 0, 1, 1], [], []>} : vector<8x128xf32>, vector<128x640xf32>, vector<8x640xf32> -> vector<8x640xf32>
    %227 = vector.extract_strided_slice %226 {offsets = [0, 512], sizes = [8, 128], strides = [1, 1]} : vector<8x640xf32> to vector<8x128xf32>
    %c40_87 = arith.constant 40 : index
    %c0_88 = arith.constant 0 : index
    %228 = vector.load %arg4[%c40_87, %c0_88] : memref<64x128xf32, #tpu.memory_space<vmem>>, vector<8x128xf32>
    tpu.vector_store %arg4[%c40_87, %c0_88], %227 {strides = array<i32>} : memref<64x128xf32, #tpu.memory_space<vmem>>, vector<8x128xf32>,
    %c48 = arith.constant 48 : index
    %c0_89 = arith.constant 0 : index
    %229 = vector.load %arg5[%c48, %c0_89] : memref<64x512xf32, #tpu.memory_space<vmem>>, vector<8x512xf32>
    %230 = vector.extract_strided_slice %226 {offsets = [0, 0], sizes = [8, 512], strides = [1, 1]} : vector<8x640xf32> to vector<8x512xf32>
    %231 = arith.addf %229, %230 : vector<8x512xf32>
    %232 = vector.extract_strided_slice %231 {offsets = [0, 0], sizes = [8, 128], strides = [1, 1]} : vector<8x512xf32> to vector<8x128xf32>
    %cst_90 = arith.constant 5.000000e-01 : f32
    %233 = vector.broadcast %cst_90 : f32 to vector<8x128xf32>
    %234 = arith.mulf %233, %232 : vector<8x128xf32>
    %235 = math.tanh %234 : vector<8x128xf32>
    %cst_91 = arith.constant 5.000000e-01 : f32
    %236 = vector.broadcast %cst_91 : f32 to vector<8x128xf32>
    %237 = arith.mulf %236, %235 : vector<8x128xf32>
    %cst_92 = arith.constant 5.000000e-01 : f32
    %238 = vector.broadcast %cst_92 : f32 to vector<8x128xf32>
    %239 = arith.addf %237, %238 : vector<8x128xf32>
    %240 = vector.extract_strided_slice %231 {offsets = [0, 128], sizes = [8, 128], strides = [1, 1]} : vector<8x512xf32> to vector<8x128xf32>
    %cst_93 = arith.constant 5.000000e-01 : f32
    %241 = vector.broadcast %cst_93 : f32 to vector<8x128xf32>
    %242 = arith.mulf %241, %240 : vector<8x128xf32>
    %243 = math.tanh %242 : vector<8x128xf32>
    %cst_94 = arith.constant 5.000000e-01 : f32
    %244 = vector.broadcast %cst_94 : f32 to vector<8x128xf32>
    %245 = arith.mulf %244, %243 : vector<8x128xf32>
    %cst_95 = arith.constant 5.000000e-01 : f32
    %246 = vector.broadcast %cst_95 : f32 to vector<8x128xf32>
    %247 = arith.addf %245, %246 : vector<8x128xf32>
    %248 = vector.extract_strided_slice %231 {offsets = [0, 256], sizes = [8, 128], strides = [1, 1]} : vector<8x512xf32> to vector<8x128xf32>
    %249 = math.tanh %248 : vector<8x128xf32>
    %250 = vector.extract_strided_slice %231 {offsets = [0, 384], sizes = [8, 128], strides = [1, 1]} : vector<8x512xf32> to vector<8x128xf32>
    %cst_96 = arith.constant 5.000000e-01 : f32
    %251 = vector.broadcast %cst_96 : f32 to vector<8x128xf32>
    %252 = arith.mulf %251, %250 : vector<8x128xf32>
    %253 = math.tanh %252 : vector<8x128xf32>
    %cst_97 = arith.constant 5.000000e-01 : f32
    %254 = vector.broadcast %cst_97 : f32 to vector<8x128xf32>
    %255 = arith.mulf %254, %253 : vector<8x128xf32>
    %cst_98 = arith.constant 5.000000e-01 : f32
    %256 = vector.broadcast %cst_98 : f32 to vector<8x128xf32>
    %257 = arith.addf %255, %256 : vector<8x128xf32>
    %258 = arith.mulf %247, %223 : vector<8x128xf32>
    %259 = arith.mulf %239, %249 : vector<8x128xf32>
    %260 = arith.addf %258, %259 : vector<8x128xf32>
    %261 = math.tanh %260 : vector<8x128xf32>
    %262 = arith.mulf %257, %261 : vector<8x128xf32>
    %cst_99 = arith.constant dense<0.000000e+00> : vector<8x640xf32>
    %263 = tpu.matmul %262, %7, %cst_99 {dimension_numbers = #tpu.dot_dimension_numbers<[1], [0], [0], [1], [0, 0, 1, 1], [], []>} : vector<8x128xf32>, vector<128x640xf32>, vector<8x640xf32> -> vector<8x640xf32>
    %264 = vector.extract_strided_slice %263 {offsets = [0, 512], sizes = [8, 128], strides = [1, 1]} : vector<8x640xf32> to vector<8x128xf32>
    %c48_100 = arith.constant 48 : index
    %c0_101 = arith.constant 0 : index
    %265 = vector.load %arg4[%c48_100, %c0_101] : memref<64x128xf32, #tpu.memory_space<vmem>>, vector<8x128xf32>
    tpu.vector_store %arg4[%c48_100, %c0_101], %264 {strides = array<i32>} : memref<64x128xf32, #tpu.memory_space<vmem>>, vector<8x128xf32>,
    %c56 = arith.constant 56 : index
    %c0_102 = arith.constant 0 : index
    %266 = vector.load %arg5[%c56, %c0_102] : memref<64x512xf32, #tpu.memory_space<vmem>>, vector<8x512xf32>
    %267 = vector.extract_strided_slice %263 {offsets = [0, 0], sizes = [8, 512], strides = [1, 1]} : vector<8x640xf32> to vector<8x512xf32>
    %268 = arith.addf %266, %267 : vector<8x512xf32>
    %269 = vector.extract_strided_slice %268 {offsets = [0, 0], sizes = [8, 128], strides = [1, 1]} : vector<8x512xf32> to vector<8x128xf32>
    %cst_103 = arith.constant 5.000000e-01 : f32
    %270 = vector.broadcast %cst_103 : f32 to vector<8x128xf32>
    %271 = arith.mulf %270, %269 : vector<8x128xf32>
    %272 = math.tanh %271 : vector<8x128xf32>
    %cst_104 = arith.constant 5.000000e-01 : f32
    %273 = vector.broadcast %cst_104 : f32 to vector<8x128xf32>
    %274 = arith.mulf %273, %272 : vector<8x128xf32>
    %cst_105 = arith.constant 5.000000e-01 : f32
    %275 = vector.broadcast %cst_105 : f32 to vector<8x128xf32>
    %276 = arith.addf %274, %275 : vector<8x128xf32>
    %277 = vector.extract_strided_slice %268 {offsets = [0, 128], sizes = [8, 128], strides = [1, 1]} : vector<8x512xf32> to vector<8x128xf32>
    %cst_106 = arith.constant 5.000000e-01 : f32
    %278 = vector.broadcast %cst_106 : f32 to vector<8x128xf32>
    %279 = arith.mulf %278, %277 : vector<8x128xf32>
    %280 = math.tanh %279 : vector<8x128xf32>
    %cst_107 = arith.constant 5.000000e-01 : f32
    %281 = vector.broadcast %cst_107 : f32 to vector<8x128xf32>
    %282 = arith.mulf %281, %280 : vector<8x128xf32>
    %cst_108 = arith.constant 5.000000e-01 : f32
    %283 = vector.broadcast %cst_108 : f32 to vector<8x128xf32>
    %284 = arith.addf %282, %283 : vector<8x128xf32>
    %285 = vector.extract_strided_slice %268 {offsets = [0, 256], sizes = [8, 128], strides = [1, 1]} : vector<8x512xf32> to vector<8x128xf32>
    %286 = math.tanh %285 : vector<8x128xf32>
    %287 = vector.extract_strided_slice %268 {offsets = [0, 384], sizes = [8, 128], strides = [1, 1]} : vector<8x512xf32> to vector<8x128xf32>
    %cst_109 = arith.constant 5.000000e-01 : f32
    %288 = vector.broadcast %cst_109 : f32 to vector<8x128xf32>
    %289 = arith.mulf %288, %287 : vector<8x128xf32>
    %290 = math.tanh %289 : vector<8x128xf32>
    %cst_110 = arith.constant 5.000000e-01 : f32
    %291 = vector.broadcast %cst_110 : f32 to vector<8x128xf32>
    %292 = arith.mulf %291, %290 : vector<8x128xf32>
    %cst_111 = arith.constant 5.000000e-01 : f32
    %293 = vector.broadcast %cst_111 : f32 to vector<8x128xf32>
    %294 = arith.addf %292, %293 : vector<8x128xf32>
    %295 = arith.mulf %284, %260 : vector<8x128xf32>
    %296 = arith.mulf %276, %286 : vector<8x128xf32>
    %297 = arith.addf %295, %296 : vector<8x128xf32>
    %298 = math.tanh %297 : vector<8x128xf32>
    %299 = arith.mulf %294, %298 : vector<8x128xf32>
    %300 = vector.extract_strided_slice %7 {offsets = [0, 512], sizes = [128, 128], strides = [1, 1]} : vector<128x640xf32> to vector<128x128xf32>
    %cst_112 = arith.constant dense<0.000000e+00> : vector<8x128xf32>
    %301 = tpu.matmul %299, %300, %cst_112 {dimension_numbers = #tpu.dot_dimension_numbers<[1], [0], [0], [1], [0, 0, 1, 1], [], []>} : vector<8x128xf32>, vector<128x128xf32>, vector<8x128xf32> -> vector<8x128xf32>
    %c56_113 = arith.constant 56 : index
    %c0_114 = arith.constant 0 : index
    %302 = vector.load %arg4[%c56_113, %c0_114] : memref<64x128xf32, #tpu.memory_space<vmem>>, vector<8x128xf32>
    tpu.vector_store %arg4[%c56_113, %c0_114], %301 {strides = array<i32>} : memref<64x128xf32, #tpu.memory_space<vmem>>, vector<8x128xf32>,
    return
  }
}

</mosaic_0001>

<llo_original>
// kernel: net_forward.1
$region0: #{net_forward.1}
  #allocation0 [shape = 'u32[]', space=smem, size = 0x4, offset = 0x4, fixed_abs, tag = 'smem constant byte address 0x4 - core index']
  #allocation1 [shape = 'u32[144,128]{1,0:T(1,128)}', space=vmem, size = 0x12000, scoped, tag = 'internal scratch']
  #allocation2 [shape = 'f32[64,512]{1,0:T(8,128)}', space=vmem, size = 0x20000, scoped, tag = 'scratch operand']
  %s0 = inlined_call_operand.vmem [shape: f32[64,128], index: 0, kind: input, shape index: {}]
  %s1 = inlined_call_operand.hbm [shape: f32[128,512], index: 1, kind: input, shape index: {}]
  %s2 = inlined_call_operand.vmem [shape: f32[1,512], index: 2, kind: input, shape index: {}]
  %s3 = inlined_call_operand.hbm [shape: f32[128,640], index: 3, kind: input, shape index: {}]
  %s4 = inlined_call_operand.vmem [shape: f32[64,128], index: 4, kind: output, shape index: {}]
  %s5 = sld [smem:[#allocation0]]
  $region34: #{net_forward.1} parent=0
    _
  %s7 = ssub.s32 1, %s5
  %s8 = scalar_select 0, %s7, %s5
  $region1: #{net_forward.1} parent=0
    #allocation3 [shape = 'u8[262144]{0}', space=vmem, size = 0x40000, scoped, tag = 'input window, operand 1, single buffered']
    #allocation4 [shape = 's32[1]{0}', space=sflag, size = 0x4, scoped, tag = 'scoped memory for net_forward.1']
    #allocation5 [shape = 'u8[327680]{0}', space=vmem, size = 0x50000, scoped, tag = 'input window, operand 3, single buffered']
    #allocation6 [shape = 's32[1]{0}', space=sflag, size = 0x4, scoped, tag = 'scoped memory for net_forward.1']
    %9 = vsyncpa [#allocation4], 0
    %10 = vsyncpa [#allocation6], 0
    // Predicated region
    $region2: #{net_forward.1} parent=1 // pred_check
      _
    $region3: #{net_forward.1} parent=1 // pred_check_branch
      %12 = sbr.rel (0) target = $region5
    $region4: #{net_forward.1} parent=1 // pred_region
      _
    $region5: #{net_forward.1} parent=1 // pred_fallthru
      _
    // Predicated region
    $region6: #{net_forward.1} parent=1 // pred_check
      _
    $region7: #{net_forward.1} parent=1 // pred_check_branch
      %14 = sbr.rel (0) target = $region9
    $region8: #{net_forward.1} parent=1 // pred_region
      %s16 = ssub.s32 8192, 8192
      %17 = vsyncadd [#allocation4], %s16
      %s18 = sshll.u32 [#allocation3], 4
      %s19 = int_to_ptr.vmem [resolvable:$true] %s18
      %24 = dma.hbm_to_vmem [thread:$0]  %s1, 8192, %s19, [#allocation4], 512, 512, 32
    $region9: #{net_forward.1} parent=1 // pred_fallthru
      _
    // Predicated region
    $region10: #{net_forward.1} parent=1 // pred_check
      _
    $region11: #{net_forward.1} parent=1 // pred_check_branch
      %26 = sbr.rel (0) target = $region13
    $region12: #{net_forward.1} parent=1 // pred_region
      _
    $region13: #{net_forward.1} parent=1 // pred_fallthru
      _
    // Predicated region
    $region14: #{net_forward.1} parent=1 // pred_check
      _
    $region15: #{net_forward.1} parent=1 // pred_check_branch
      %28 = sbr.rel (0) target = $region17
    $region16: #{net_forward.1} parent=1 // pred_region
      %s30 = ssub.s32 10240, 10240
      %31 = vsyncadd [#allocation6], %s30
      %s32 = sshll.u32 [#allocation5], 4
      %s33 = int_to_ptr.vmem [resolvable:$true] %s32
      %38 = dma.hbm_to_vmem [thread:$0]  %s3, 10240, %s33, [#allocation6], 640, 640, 40
    $region17: #{net_forward.1} parent=1 // pred_fallthru
      _
    // Predicated region
    $region18: #{net_forward.1} parent=1 // pred_check
      _
    $region19: #{net_forward.1} parent=1 // pred_check_branch
      %40 = sbr.rel (0) target = $region21
    $region20: #{net_forward.1} parent=1 // pred_region
      %41 = dma.done [#allocation4], 8192
    $region21: #{net_forward.1} parent=1 // pred_fallthru
      _
    // Predicated region
    $region22: #{net_forward.1} parent=1 // pred_check
      _
    $region23: #{net_forward.1} parent=1 // pred_check_branch
      %43 = sbr.rel (0) target = $region25
    $region24: #{net_forward.1} parent=1 // pred_region
      %44 = dma.done [#allocation6], 10240
    $region25: #{net_forward.1} parent=1 // pred_fallthru
      _
    %v45 = vld [vmem:[%s0] sm:$0xff]
    %v46 = vld [vmem:[%s0 + $0x8] sm:$0xff]
    %v47 = vld [vmem:[%s0 + $0x10] sm:$0xff]
    %v48 = vld [vmem:[%s0 + $0x18] sm:$0xff]
    %v49 = vld [vmem:[%s0 + $0x20] sm:$0xff]
    %v50 = vld [vmem:[%s0 + $0x28] sm:$0xff]
    %v51 = vld [vmem:[%s0 + $0x30] sm:$0xff]
    %v52 = vld [vmem:[%s0 + $0x38] sm:$0xff]
    %v53 = vld [vmem:[#allocation3] sm:$0xff]
    %v54 = vld [vmem:[#allocation3 + $0x8] sm:$0xff]
    %v55 = vld [vmem:[#allocation3 + $0x10] sm:$0xff]
    %v56 = vld [vmem:[#allocation3 + $0x18] sm:$0xff]
    %v57 = vld [vmem:[#allocation3 + $0x20] sm:$0xff]
    %v58 = vld [vmem:[#allocation3 + $0x28] sm:$0xff]
    %v59 = vld [vmem:[#allocation3 + $0x30] sm:$0xff]
    %v60 = vld [vmem:[#allocation3 + $0x38] sm:$0xff]
    %v61 = vld [vmem:[#allocation3 + $0x40] sm:$0xff]
    %v62 = vld [vmem:[#allocation3 + $0x48] sm:$0xff]
    %v63 = vld [vmem:[#allocation3 + $0x50] sm:$0xff]
    %v64 = vld [vmem:[#allocation3 + $0x58] sm:$0xff]
    %v65 = vld [vmem:[#allocation3 + $0x60] sm:$0xff]
    %v66 = vld [vmem:[#allocation3 + $0x68] sm:$0xff]
    %v67 = vld [vmem:[#allocation3 + $0x70] sm:$0xff]
    %v68 = vld [vmem:[#allocation3 + $0x78] sm:$0xff]
    %v69 = vld [vmem:[#allocation3 + $0x80] sm:$0xff]
    %v70 = vld [vmem:[#allocation3 + $0x88] sm:$0xff]
    %v71 = vld [vmem:[#allocation3 + $0x90] sm:$0xff]
    %v72 = vld [vmem:[#allocation3 + $0x98] sm:$0xff]
    %v73 = vld [vmem:[#allocation3 + $0xa0] sm:$0xff]
    %v74 = vld [vmem:[#allocation3 + $0xa8] sm:$0xff]
    %v75 = vld [vmem:[#allocation3 + $0xb0] sm:$0xff]
    %v76 = vld [vmem:[#allocation3 + $0xb8] sm:$0xff]
    %v77 = vld [vmem:[#allocation3 + $0xc0] sm:$0xff]
    %v78 = vld [vmem:[#allocation3 + $0xc8] sm:$0xff]
    %v79 = vld [vmem:[#allocation3 + $0xd0] sm:$0xff]
    %v80 = vld [vmem:[#allocation3 + $0xd8] sm:$0xff]
    %v81 = vld [vmem:[#allocation3 + $0xe0] sm:$0xff]
    %v82 = vld [vmem:[#allocation3 + $0xe8] sm:$0xff]
    %v83 = vld [vmem:[#allocation3 + $0xf0] sm:$0xff]
    %v84 = vld [vmem:[#allocation3 + $0xf8] sm:$0xff]
    %v85 = vld [vmem:[#allocation3 + $0x100] sm:$0xff]
    %v86 = vld [vmem:[#allocation3 + $0x108] sm:$0xff]
    %v87 = vld [vmem:[#allocation3 + $0x110] sm:$0xff]
    %v88 = vld [vmem:[#allocation3 + $0x118] sm:$0xff]
    %v89 = vld [vmem:[#allocation3 + $0x120] sm:$0xff]
    %v90 = vld [vmem:[#allocation3 + $0x128] sm:$0xff]
    %v91 = vld [vmem:[#allocation3 + $0x130] sm:$0xff]
    %v92 = vld [vmem:[#allocation3 + $0x138] sm:$0xff]
    %v93 = vld [vmem:[#allocation3 + $0x140] sm:$0xff]
    %v94 = vld [vmem:[#allocation3 + $0x148] sm:$0xff]
    %v95 = vld [vmem:[#allocation3 + $0x150] sm:$0xff]
    %v96 = vld [vmem:[#allocation3 + $0x158] sm:$0xff]
    %v97 = vld [vmem:[#allocation3 + $0x160] sm:$0xff]
    %v98 = vld [vmem:[#allocation3 + $0x168] sm:$0xff]
    %v99 = vld [vmem:[#allocation3 + $0x170] sm:$0xff]
    %v100 = vld [vmem:[#allocation3 + $0x178] sm:$0xff]
    %v101 = vld [vmem:[#allocation3 + $0x180] sm:$0xff]
    %v102 = vld [vmem:[#allocation3 + $0x188] sm:$0xff]
    %v103 = vld [vmem:[#allocation3 + $0x190] sm:$0xff]
    %v104 = vld [vmem:[#allocation3 + $0x198] sm:$0xff]
    %v105 = vld [vmem:[#allocation3 + $0x1a0] sm:$0xff]
    %v106 = vld [vmem:[#allocation3 + $0x1a8] sm:$0xff]
    %v107 = vld [vmem:[#allocation3 + $0x1b0] sm:$0xff]
    %v108 = vld [vmem:[#allocation3 + $0x1b8] sm:$0xff]
    %v109 = vld [vmem:[#allocation3 + $0x1c0] sm:$0xff]
    %v110 = vld [vmem:[#allocation3 + $0x1c8] sm:$0xff]
    %v111 = vld [vmem:[#allocation3 + $0x1d0] sm:$0xff]
    %v112 = vld [vmem:[#allocation3 + $0x1d8] sm:$0xff]
    %v113 = vld [vmem:[#allocation3 + $0x1e0] sm:$0xff]
    %v114 = vld [vmem:[#allocation3 + $0x1e8] sm:$0xff]
    %v115 = vld [vmem:[#allocation3 + $0x1f0] sm:$0xff]
    %v116 = vld [vmem:[#allocation3 + $0x1f8] sm:$0xff]
    %v117 = vld [vmem:[%s2] sm:$0xf]
    %v119 = vlaneseq
    %v120 = vshrl.u32 %v119, 7
    %v121 = vsub.s32 0, %v120
    %v122 = vrot.slane %v117, %v121
    %v123 = vlaneseq
    %v124 = vshrl.u32 %v123, 7
    %v125 = vsub.s32 1, %v124
    %v126 = vrot.slane %v117, %v125
    %v127 = vlaneseq
    %v128 = vshrl.u32 %v127, 7
    %v129 = vsub.s32 2, %v128
    %v130 = vrot.slane %v117, %v129
    %v131 = vlaneseq
    %v132 = vshrl.u32 %v131, 7
    %v133 = vsub.s32 3, %v132
    %v134 = vrot.slane %v117, %v133
    %139 = vmatprep.subr.mxu0 %v114
    %140 = vmatpush1.msra.mxu0 %v113
    %141 = vmatprep.subr.mxu0 %v110
    %142 = vmatpush1.msra.mxu0 %v109
    %143 = vmatprep.subr.mxu0 %v106
    %144 = vmatpush1.msra.mxu0 %v105
    %145 = vmatprep.subr.mxu0 %v102
    %146 = vmatpush1.msra.mxu0 %v101
    %147 = vmatprep.subr.mxu0 %v98
    %148 = vmatpush1.msra.mxu0 %v97
    %149 = vmatprep.subr.mxu0 %v94
    %150 = vmatpush1.msra.mxu0 %v93
    %151 = vmatprep.subr.mxu0 %v90
    %152 = vmatpush1.msra.mxu0 %v89
    %153 = vmatprep.subr.mxu0 %v86
    %154 = vmatpush1.msra.mxu0 %v85
    %155 = vmatprep.subr.mxu0 %v82
    %156 = vmatpush1.msra.mxu0 %v81
    %157 = vmatprep.subr.mxu0 %v78
    %158 = vmatpush1.msra.mxu0 %v77
    %159 = vmatprep.subr.mxu0 %v74
    %160 = vmatpush1.msra.mxu0 %v73
    %161 = vmatprep.subr.mxu0 %v70
    %162 = vmatpush1.msra.mxu0 %v69
    %163 = vmatprep.subr.mxu0 %v66
    %164 = vmatpush1.msra.mxu0 %v65
    %165 = vmatprep.subr.mxu0 %v62
    %166 = vmatpush1.msra.mxu0 %v61
    %167 = vmatprep.subr.mxu0 %v58
    %168 = vmatpush1.msra.mxu0 %v57
    %169 = vmatprep.subr.mxu0 %v54
    %170 = vmatpush1.msra.mxu0 %v53
    %171 = vmatprep.subr.mxu0 0.0
    %172 = vmatpush2.msra.mxu0 0.0
    %173 = vmatprep.subr.mxu0 0.0
    %174 = vmatpush2.msra.mxu0 0.0
    %175 = vmatprep.subr.mxu0 0.0
    %176 = vmatpush2.msra.mxu0 0.0
    %177 = vmatprep.subr.mxu0 0.0
    %178 = vmatpush2.msra.mxu0 0.0
    %179 = vmatprep.subr.mxu0 0.0
    %180 = vmatpush2.msra.mxu0 0.0
    %181 = vmatprep.subr.mxu0 0.0
    %182 = vmatpush2.msra.mxu0 0.0
    %183 = vmatprep.subr.mxu0 0.0
    %184 = vmatpush2.msra.mxu0 0.0
    %185 = vmatprep.subr.mxu0 0.0
    %186 = vmatpush2.msra.mxu0 0.0
    %187 = vmatprep.subr.mxu0 0.0
    %188 = vmatpush2.msra.mxu0 0.0
    %189 = vmatprep.subr.mxu0 0.0
    %190 = vmatpush2.msra.mxu0 0.0
    %191 = vmatprep.subr.mxu0 0.0
    %192 = vmatpush2.msra.mxu0 0.0
    %193 = vmatprep.subr.mxu0 0.0
    %194 = vmatpush2.msra.mxu0 0.0
    %195 = vmatprep.subr.mxu0 0.0
    %196 = vmatpush2.msra.mxu0 0.0
    %197 = vmatprep.subr.mxu0 0.0
    %198 = vmatpush2.msra.mxu0 0.0
    %199 = vmatprep.subr.mxu0 0.0
    %200 = vmatpush2.msra.mxu0 0.0
    %201 = vmatprep.subr.mxu0 0.0
    %202 = vmatpush2.msra.mxu0 0.0
    %203 = vmatprep.mubr.f32.mxu0 0.0
    %204 = vmatmul.mubr.f32.gmra.mxu0 %v45
    %v205 = vpop.f32.mrf.mxu0
    %v206 = vadd.f32 %v122, %v205
    %v207 = vpop.f32.mrf.mxu0
    %v208 = vadd.f32 %v126, %v207
    %209 = vmatprep.mubr.f32.mxu0 0.0
    %210 = vmatmul.mubr.f32.gmra.mxu0 %v46
    %v211 = vpop.f32.mrf.mxu0
    %v212 = vadd.f32 %v122, %v211
    %v213 = vpop.f32.mrf.mxu0
    %v214 = vadd.f32 %v126, %v213
    %215 = vmatprep.mubr.f32.mxu0 0.0
    %216 = vmatmul.mubr.f32.gmra.mxu0 %v47
    %v217 = vpop.f32.mrf.mxu0
    %v218 = vadd.f32 %v122, %v217
    %v219 = vpop.f32.mrf.mxu0
    %v220 = vadd.f32 %v126, %v219
    %221 = vmatprep.mubr.f32.mxu0 0.0
    %222 = vmatmul.mubr.f32.gmra.mxu0 %v48
    %v223 = vpop.f32.mrf.mxu0
    %v224 = vadd.f32 %v122, %v223
    %v225 = vpop.f32.mrf.mxu0
    %v226 = vadd.f32 %v126, %v225
    %227 = vmatprep.mubr.f32.mxu0 0.0
    %228 = vmatmul.mubr.f32.gmra.mxu0 %v49
    %v229 = vpop.f32.mrf.mxu0
    %v230 = vadd.f32 %v122, %v229
    %v231 = vpop.f32.mrf.mxu0
    %v232 = vadd.f32 %v126, %v231
    %233 = vmatprep.mubr.f32.mxu0 0.0
    %234 = vmatmul.mubr.f32.gmra.mxu0 %v50
    %v235 = vpop.f32.mrf.mxu0
    %v236 = vadd.f32 %v122, %v235
    %v237 = vpop.f32.mrf.mxu0
    %v238 = vadd.f32 %v126, %v237
    %239 = vmatprep.mubr.f32.mxu0 0.0
    %240 = vmatmul.mubr.f32.gmra.mxu0 %v51
    %v241 = vpop.f32.mrf.mxu0
    %v242 = vadd.f32 %v122, %v241
    %v243 = vpop.f32.mrf.mxu0
    %v244 = vadd.f32 %v126, %v243
    %245 = vmatprep.mubr.f32.mxu0 0.0
    %246 = vmatmul.mubr.f32.gmra.mxu0 %v52
    %v247 = vpop.f32.mrf.mxu0
    %v248 = vadd.f32 %v122, %v247
    %v249 = vpop.f32.mrf.mxu0
    %v250 = vadd.f32 %v126, %v249
    %251 = vdwg.mxu0
    %252 = vmatprep.subr.mxu0 %v116
    %253 = vmatpush1.msra.mxu0 %v115
    %254 = vmatprep.subr.mxu0 %v112
    %255 = vmatpush1.msra.mxu0 %v111
    %256 = vmatprep.subr.mxu0 %v108
    %257 = vmatpush1.msra.mxu0 %v107
    %258 = vmatprep.subr.mxu0 %v104
    %259 = vmatpush1.msra.mxu0 %v103
    %260 = vmatprep.subr.mxu0 %v100
    %261 = vmatpush1.msra.mxu0 %v99
    %262 = vmatprep.subr.mxu0 %v96
    %263 = vmatpush1.msra.mxu0 %v95
    %264 = vmatprep.subr.mxu0 %v92
    %265 = vmatpush1.msra.mxu0 %v91
    %266 = vmatprep.subr.mxu0 %v88
    %267 = vmatpush1.msra.mxu0 %v87
    %268 = vmatprep.subr.mxu0 %v84
    %269 = vmatpush1.msra.mxu0 %v83
    %270 = vmatprep.subr.mxu0 %v80
    %271 = vmatpush1.msra.mxu0 %v79
    %272 = vmatprep.subr.mxu0 %v76
    %273 = vmatpush1.msra.mxu0 %v75
    %274 = vmatprep.subr.mxu0 %v72
    %275 = vmatpush1.msra.mxu0 %v71
    %276 = vmatprep.subr.mxu0 %v68
    %277 = vmatpush1.msra.mxu0 %v67
    %278 = vmatprep.subr.mxu0 %v64
    %279 = vmatpush1.msra.mxu0 %v63
    %280 = vmatprep.subr.mxu0 %v60
    %281 = vmatpush1.msra.mxu0 %v59
    %282 = vmatprep.subr.mxu0 %v56
    %283 = vmatpush1.msra.mxu0 %v55
    %284 = vmatprep.subr.mxu0 0.0
    %285 = vmatpush2.msra.mxu0 0.0
    %286 = vmatprep.subr.mxu0 0.0
    %287 = vmatpush2.msra.mxu0 0.0
    %288 = vmatprep.subr.mxu0 0.0
    %289 = vmatpush2.msra.mxu0 0.0
    %290 = vmatprep.subr.mxu0 0.0
    %291 = vmatpush2.msra.mxu0 0.0
    %292 = vmatprep.subr.mxu0 0.0
    %293 = vmatpush2.msra.mxu0 0.0
    %294 = vmatprep.subr.mxu0 0.0
    %295 = vmatpush2.msra.mxu0 0.0
    %296 = vmatprep.subr.mxu0 0.0
    %297 = vmatpush2.msra.mxu0 0.0
    %298 = vmatprep.subr.mxu0 0.0
    %299 = vmatpush2.msra.mxu0 0.0
    %300 = vmatprep.subr.mxu0 0.0
    %301 = vmatpush2.msra.mxu0 0.0
    %302 = vmatprep.subr.mxu0 0.0
    %303 = vmatpush2.msra.mxu0 0.0
    %304 = vmatprep.subr.mxu0 0.0
    %305 = vmatpush2.msra.mxu0 0.0
    %306 = vmatprep.subr.mxu0 0.0
    %307 = vmatpush2.msra.mxu0 0.0
    %308 = vmatprep.subr.mxu0 0.0
    %309 = vmatpush2.msra.mxu0 0.0
    %310 = vmatprep.subr.mxu0 0.0
    %311 = vmatpush2.msra.mxu0 0.0
    %312 = vmatprep.subr.mxu0 0.0
    %313 = vmatpush2.msra.mxu0 0.0
    %314 = vmatprep.subr.mxu0 0.0
    %315 = vmatpush2.msra.mxu0 0.0
    %316 = vmatprep.mubr.f32.mxu0 0.0
    %317 = vmatmul.mubr.f32.gmra.mxu0 %v45
    %v318 = vpop.f32.mrf.mxu0
    %v319 = vadd.f32 %v130, %v318
    %v320 = vpop.f32.mrf.mxu0
    %v321 = vadd.f32 %v134, %v320
    %322 = vmatprep.mubr.f32.mxu0 0.0
    %323 = vmatmul.mubr.f32.gmra.mxu0 %v46
    %v324 = vpop.f32.mrf.mxu0
    %v325 = vadd.f32 %v130, %v324
    %v326 = vpop.f32.mrf.mxu0
    %v327 = vadd.f32 %v134, %v326
    %328 = vmatprep.mubr.f32.mxu0 0.0
    %329 = vmatmul.mubr.f32.gmra.mxu0 %v47
    %v330 = vpop.f32.mrf.mxu0
    %v331 = vadd.f32 %v130, %v330
    %v332 = vpop.f32.mrf.mxu0
    %v333 = vadd.f32 %v134, %v332
    %334 = vmatprep.mubr.f32.mxu0 0.0
    %335 = vmatmul.mubr.f32.gmra.mxu0 %v48
    %v336 = vpop.f32.mrf.mxu0
    %v337 = vadd.f32 %v130, %v336
    %v338 = vpop.f32.mrf.mxu0
    %v339 = vadd.f32 %v134, %v338
    %340 = vmatprep.mubr.f32.mxu0 0.0
    %341 = vmatmul.mubr.f32.gmra.mxu0 %v49
    %v342 = vpop.f32.mrf.mxu0
    %v343 = vadd.f32 %v130, %v342
    %v344 = vpop.f32.mrf.mxu0
    %v345 = vadd.f32 %v134, %v344
    %346 = vmatprep.mubr.f32.mxu0 0.0
    %347 = vmatmul.mubr.f32.gmra.mxu0 %v50
    %v348 = vpop.f32.mrf.mxu0
    %v349 = vadd.f32 %v130, %v348
    %v350 = vpop.f32.mrf.mxu0
    %v351 = vadd.f32 %v134, %v350
    %352 = vmatprep.mubr.f32.mxu0 0.0
    %353 = vmatmul.mubr.f32.gmra.mxu0 %v51
    %v354 = vpop.f32.mrf.mxu0
    %v355 = vadd.f32 %v130, %v354
    %v356 = vpop.f32.mrf.mxu0
    %v357 = vadd.f32 %v134, %v356
    %358 = vmatprep.mubr.f32.mxu0 0.0
    %359 = vmatmul.mubr.f32.gmra.mxu0 %v52
    %v360 = vpop.f32.mrf.mxu0
    %v361 = vadd.f32 %v130, %v360
    %v362 = vpop.f32.mrf.mxu0
    %v363 = vadd.f32 %v134, %v362
    %364 = vdwg.mxu0
    %365 = vst [vmem:[#allocation2] sm:$0xff] %v206
    %366 = vst [vmem:[#allocation2 + $0x8] sm:$0xff] %v208
    %367 = vst [vmem:[#allocation2 + $0x10] sm:$0xff] %v319
    %368 = vst [vmem:[#allocation2 + $0x18] sm:$0xff] %v321
    %369 = vst [vmem:[#allocation2 + $0x20] sm:$0xff] %v212
    %370 = vst [vmem:[#allocation2 + $0x28] sm:$0xff] %v214
    %371 = vst [vmem:[#allocation2 + $0x30] sm:$0xff] %v325
    %372 = vst [vmem:[#allocation2 + $0x38] sm:$0xff] %v327
    %373 = vst [vmem:[#allocation2 + $0x40] sm:$0xff] %v218
    %374 = vst [vmem:[#allocation2 + $0x48] sm:$0xff] %v220
    %375 = vst [vmem:[#allocation2 + $0x50] sm:$0xff] %v331
    %376 = vst [vmem:[#allocation2 + $0x58] sm:$0xff] %v333
    %377 = vst [vmem:[#allocation2 + $0x60] sm:$0xff] %v224
    %378 = vst [vmem:[#allocation2 + $0x68] sm:$0xff] %v226
    %379 = vst [vmem:[#allocation2 + $0x70] sm:$0xff] %v337
    %380 = vst [vmem:[#allocation2 + $0x78] sm:$0xff] %v339
    %381 = vst [vmem:[#allocation2 + $0x80] sm:$0xff] %v230
    %382 = vst [vmem:[#allocation2 + $0x88] sm:$0xff] %v232
    %383 = vst [vmem:[#allocation2 + $0x90] sm:$0xff] %v343
    %384 = vst [vmem:[#allocation2 + $0x98] sm:$0xff] %v345
    %385 = vst [vmem:[#allocation2 + $0xa0] sm:$0xff] %v236
    %386 = vst [vmem:[#allocation2 + $0xa8] sm:$0xff] %v238
    %387 = vst [vmem:[#allocation2 + $0xb0] sm:$0xff] %v349
    %388 = vst [vmem:[#allocation2 + $0xb8] sm:$0xff] %v351
    %389 = vst [vmem:[#allocation2 + $0xc0] sm:$0xff] %v242
    %390 = vst [vmem:[#allocation2 + $0xc8] sm:$0xff] %v244
    %391 = vst [vmem:[#allocation2 + $0xd0] sm:$0xff] %v355
    %392 = vst [vmem:[#allocation2 + $0xd8] sm:$0xff] %v357
    %393 = vst [vmem:[#allocation2 + $0xe0] sm:$0xff] %v248
    %394 = vst [vmem:[#allocation2 + $0xe8] sm:$0xff] %v250
    %395 = vst [vmem:[#allocation2 + $0xf0] sm:$0xff] %v361
    %396 = vst [vmem:[#allocation2 + $0xf8] sm:$0xff] %v363
    %v397 = vld [vmem:[#allocation5] sm:$0xff]
    %v398 = vld [vmem:[#allocation5 + $0x8] sm:$0xff]
    %v399 = vld [vmem:[#allocation5 + $0x10] sm:$0xff]
    %v400 = vld [vmem:[#allocation5 + $0x18] sm:$0xff]
    %v401 = vld [vmem:[#allocation5 + $0x20] sm:$0xff]
    %v402 = vld [vmem:[#allocation5 + $0x28] sm:$0xff]
    %v403 = vld [vmem:[#allocation5 + $0x30] sm:$0xff]
    %v404 = vld [vmem:[#allocation5 + $0x38] sm:$0xff]
    %v405 = vld [vmem:[#allocation5 + $0x40] sm:$0xff]
    %v406 = vld [vmem:[#allocation5 + $0x48] sm:$0xff]
    %v407 = vld [vmem:[#allocation5 + $0x50] sm:$0xff]
    %v408 = vld [vmem:[#allocation5 + $0x58] sm:$0xff]
    %v409 = vld [vmem:[#allocation5 + $0x60] sm:$0xff]
    %v410 = vld [vmem:[#allocation5 + $0x68] sm:$0xff]
    %v411 = vld [vmem:[#allocation5 + $0x70] sm:$0xff]
    %v412 = vld [vmem:[#allocation5 + $0x78] sm:$0xff]
    %v413 = vld [vmem:[#allocation5 + $0x80] sm:$0xff]
    %v414 = vld [vmem:[#allocation5 + $0x88] sm:$0xff]
    %v415 = vld [vmem:[#allocation5 + $0x90] sm:$0xff]
    %v416 = vld [vmem:[#allocation5 + $0x98] sm:$0xff]
    %v417 = vld [vmem:[#allocation5 + $0xa0] sm:$0xff]
    %v418 = vld [vmem:[#allocation5 + $0xa8] sm:$0xff]
    %v419 = vld [vmem:[#allocation5 + $0xb0] sm:$0xff]
    %v420 = vld [vmem:[#allocation5 + $0xb8] sm:$0xff]
    %v421 = vld [vmem:[#allocation5 + $0xc0] sm:$0xff]
    %v422 = vld [vmem:[#allocation5 + $0xc8] sm:$0xff]
    %v423 = vld [vmem:[#allocation5 + $0xd0] sm:$0xff]
    %v424 = vld [vmem:[#allocation5 + $0xd8] sm:$0xff]
    %v425 = vld [vmem:[#allocation5 + $0xe0] sm:$0xff]
    %v426 = vld [vmem:[#allocation5 + $0xe8] sm:$0xff]
    %v427 = vld [vmem:[#allocation5 + $0xf0] sm:$0xff]
    %v428 = vld [vmem:[#allocation5 + $0xf8] sm:$0xff]
    %v429 = vld [vmem:[#allocation5 + $0x100] sm:$0xff]
    %v430 = vld [vmem:[#allocation5 + $0x108] sm:$0xff]
    %v431 = vld [vmem:[#allocation5 + $0x110] sm:$0xff]
    %v432 = vld [vmem:[#allocation5 + $0x118] sm:$0xff]
    %v433 = vld [vmem:[#allocation5 + $0x120] sm:$0xff]
    %v434 = vld [vmem:[#allocation5 + $0x128] sm:$0xff]
    %v435 = vld [vmem:[#allocation5 + $0x130] sm:$0xff]
    %v436 = vld [vmem:[#allocation5 + $0x138] sm:$0xff]
    %v437 = vld [vmem:[#allocation5 + $0x140] sm:$0xff]
    %v438 = vld [vmem:[#allocation5 + $0x148] sm:$0xff]
    %v439 = vld [vmem:[#allocation5 + $0x150] sm:$0xff]
    %v440 = vld [vmem:[#allocation5 + $0x158] sm:$0xff]
    %v441 = vld [vmem:[#allocation5 + $0x160] sm:$0xff]
    %v442 = vld [vmem:[#allocation5 + $0x168] sm:$0xff]
    %v443 = vld [vmem:[#allocation5 + $0x170] sm:$0xff]
    %v444 = vld [vmem:[#allocation5 + $0x178] sm:$0xff]
    %v445 = vld [vmem:[#allocation5 + $0x180] sm:$0xff]
    %v446 = vld [vmem:[#allocation5 + $0x188] sm:$0xff]
    %v447 = vld [vmem:[#allocation5 + $0x190] sm:$0xff]
    %v448 = vld [vmem:[#allocation5 + $0x198] sm:$0xff]
    %v449 = vld [vmem:[#allocation5 + $0x1a0] sm:$0xff]
    %v450 = vld [vmem:[#allocation5 + $0x1a8] sm:$0xff]
    %v451 = vld [vmem:[#allocation5 + $0x1b0] sm:$0xff]
    %v452 = vld [vmem:[#allocation5 + $0x1b8] sm:$0xff]
    %v453 = vld [vmem:[#allocation5 + $0x1c0] sm:$0xff]
    %v454 = vld [vmem:[#allocation5 + $0x1c8] sm:$0xff]
    %v455 = vld [vmem:[#allocation5 + $0x1d0] sm:$0xff]
    %v456 = vld [vmem:[#allocation5 + $0x1d8] sm:$0xff]
    %v457 = vld [vmem:[#allocation5 + $0x1e0] sm:$0xff]
    %v458 = vld [vmem:[#allocation5 + $0x1e8] sm:$0xff]
    %v459 = vld [vmem:[#allocation5 + $0x1f0] sm:$0xff]
    %v460 = vld [vmem:[#allocation5 + $0x1f8] sm:$0xff]
    %v461 = vld [vmem:[#allocation5 + $0x200] sm:$0xff]
    %v462 = vld [vmem:[#allocation5 + $0x208] sm:$0xff]
    %v463 = vld [vmem:[#allocation5 + $0x210] sm:$0xff]
    %v464 = vld [vmem:[#allocation5 + $0x218] sm:$0xff]
    %v465 = vld [vmem:[#allocation5 + $0x220] sm:$0xff]
    %v466 = vld [vmem:[#allocation5 + $0x228] sm:$0xff]
    %v467 = vld [vmem:[#allocation5 + $0x230] sm:$0xff]
    %v468 = vld [vmem:[#allocation5 + $0x238] sm:$0xff]
    %v469 = vld [vmem:[#allocation5 + $0x240] sm:$0xff]
    %v470 = vld [vmem:[#allocation5 + $0x248] sm:$0xff]
    %v471 = vld [vmem:[#allocation5 + $0x250] sm:$0xff]
    %v472 = vld [vmem:[#allocation5 + $0x258] sm:$0xff]
    %v473 = vld [vmem:[#allocation5 + $0x260] sm:$0xff]
    %v474 = vld [vmem:[#allocation5 + $0x268] sm:$0xff]
    %v475 = vld [vmem:[#allocation5 + $0x270] sm:$0xff]
    %v476 = vld [vmem:[#allocation5 + $0x278] sm:$0xff]
    %v477 = vld [vmem:[#allocation2] sm:$0xff]
    %v478 = vld [vmem:[#allocation2 + $0x8] sm:$0xff]
    %v479 = vld [vmem:[#allocation2 + $0x10] sm:$0xff]
    %v480 = vld [vmem:[#allocation2 + $0x18] sm:$0xff]
    %v481 = vmul.f32 %v477, 0.5
    %v482 = vtanh.pop %v481
    %v483 = vmul.f32 %v482, 0.5
    %v484 = vadd.f32 %v483, 0.5
    %v485 = vmul.f32 %v478, 0.5
    %v486 = vtanh.pop %v485
    %v487 = vmul.f32 %v486, 0.5
    %v488 = vadd.f32 %v487, 0.5
    %v489 = vtanh.pop %v479
    %v490 = vmul.f32 %v480, 0.5
    %v491 = vtanh.pop %v490
    %v492 = vmul.f32 %v491, 0.5
    %v493 = vadd.f32 %v492, 0.5
    %v494 = vmul.f32 %v488, 0.0
    %v495 = vmul.f32 %v484, %v489
    %v496 = vadd.f32 %v494, %v495
    %v497 = vtanh.pop %v496
    %v498 = vmul.f32 %v493, %v497
    %499 = vmatprep.subr.mxu0 %v473
    %500 = vmatpush1.msra.mxu0 %v472
    %501 = vmatprep.subr.mxu0 %v468
    %502 = vmatpush1.msra.mxu0 %v467
    %503 = vmatprep.subr.mxu0 %v463
    %504 = vmatpush1.msra.mxu0 %v462
    %505 = vmatprep.subr.mxu0 %v458
    %506 = vmatpush1.msra.mxu0 %v457
    %507 = vmatprep.subr.mxu0 %v453
    %508 = vmatpush1.msra.mxu0 %v452
    %509 = vmatprep.subr.mxu0 %v448
    %510 = vmatpush1.msra.mxu0 %v447
    %511 = vmatprep.subr.mxu0 %v443
    %512 = vmatpush1.msra.mxu0 %v442
    %513 = vmatprep.subr.mxu0 %v438
    %514 = vmatpush1.msra.mxu0 %v437
    %515 = vmatprep.subr.mxu0 %v433
    %516 = vmatpush1.msra.mxu0 %v432
    %517 = vmatprep.subr.mxu0 %v428
    %518 = vmatpush1.msra.mxu0 %v427
    %519 = vmatprep.subr.mxu0 %v423
    %520 = vmatpush1.msra.mxu0 %v422
    %521 = vmatprep.subr.mxu0 %v418
    %522 = vmatpush1.msra.mxu0 %v417
    %523 = vmatprep.subr.mxu0 %v413
    %524 = vmatpush1.msra.mxu0 %v412
    %525 = vmatprep.subr.mxu0 %v408
    %526 = vmatpush1.msra.mxu0 %v407
    %527 = vmatprep.subr.mxu0 %v403
    %528 = vmatpush1.msra.mxu0 %v402
    %529 = vmatprep.subr.mxu0 %v398
    %530 = vmatpush1.msra.mxu0 %v397
    %531 = vmatprep.subr.mxu0 0.0
    %532 = vmatpush2.msra.mxu0 0.0
    %533 = vmatprep.subr.mxu0 0.0
    %534 = vmatpush2.msra.mxu0 0.0
    %535 = vmatprep.subr.mxu0 0.0
    %536 = vmatpush2.msra.mxu0 0.0
    %537 = vmatprep.subr.mxu0 0.0
    %538 = vmatpush2.msra.mxu0 0.0
    %539 = vmatprep.subr.mxu0 0.0
    %540 = vmatpush2.msra.mxu0 0.0
    %541 = vmatprep.subr.mxu0 0.0
    %542 = vmatpush2.msra.mxu0 0.0
    %543 = vmatprep.subr.mxu0 0.0
    %544 = vmatpush2.msra.mxu0 0.0
    %545 = vmatprep.subr.mxu0 0.0
    %546 = vmatpush2.msra.mxu0 0.0
    %547 = vmatprep.subr.mxu0 0.0
    %548 = vmatpush2.msra.mxu0 0.0
    %549 = vmatprep.subr.mxu0 0.0
    %550 = vmatpush2.msra.mxu0 0.0
    %551 = vmatprep.subr.mxu0 0.0
    %552 = vmatpush2.msra.mxu0 0.0
    %553 = vmatprep.subr.mxu0 0.0
    %554 = vmatpush2.msra.mxu0 0.0
    %555 = vmatprep.subr.mxu0 0.0
    %556 = vmatpush2.msra.mxu0 0.0
    %557 = vmatprep.subr.mxu0 0.0
    %558 = vmatpush2.msra.mxu0 0.0
    %559 = vmatprep.subr.mxu0 0.0
    %560 = vmatpush2.msra.mxu0 0.0
    %561 = vmatprep.subr.mxu0 0.0
    %562 = vmatpush2.msra.mxu0 0.0
    %563 = vmatprep.mubr.f32.mxu0 0.0
    %564 = vmatmul.mubr.f32.gmra.mxu0 %v498
    %v565 = vpop.f32.mrf.mxu0
    %v566 = vadd.f32 0.0, %v565
    %v567 = vpop.f32.mrf.mxu0
    %v568 = vadd.f32 0.0, %v567
    %569 = vdwg.mxu0
    %570 = vmatprep.subr.mxu0 %v475
    %571 = vmatpush1.msra.mxu0 %v474
    %572 = vmatprep.subr.mxu0 %v470
    %573 = vmatpush1.msra.mxu0 %v469
    %574 = vmatprep.subr.mxu0 %v465
    %575 = vmatpush1.msra.mxu0 %v464
    %576 = vmatprep.subr.mxu0 %v460
    %577 = vmatpush1.msra.mxu0 %v459
    %578 = vmatprep.subr.mxu0 %v455
    %579 = vmatpush1.msra.mxu0 %v454
    %580 = vmatprep.subr.mxu0 %v450
    %581 = vmatpush1.msra.mxu0 %v449
    %582 = vmatprep.subr.mxu0 %v445
    %583 = vmatpush1.msra.mxu0 %v444
    %584 = vmatprep.subr.mxu0 %v440
    %585 = vmatpush1.msra.mxu0 %v439
    %586 = vmatprep.subr.mxu0 %v435
    %587 = vmatpush1.msra.mxu0 %v434
    %588 = vmatprep.subr.mxu0 %v430
    %589 = vmatpush1.msra.mxu0 %v429
    %590 = vmatprep.subr.mxu0 %v425
    %591 = vmatpush1.msra.mxu0 %v424
    %592 = vmatprep.subr.mxu0 %v420
    %593 = vmatpush1.msra.mxu0 %v419
    %594 = vmatprep.subr.mxu0 %v415
    %595 = vmatpush1.msra.mxu0 %v414
    %596 = vmatprep.subr.mxu0 %v410
    %597 = vmatpush1.msra.mxu0 %v409
    %598 = vmatprep.subr.mxu0 %v405
    %599 = vmatpush1.msra.mxu0 %v404
    %600 = vmatprep.subr.mxu0 %v400
    %601 = vmatpush1.msra.mxu0 %v399
    %602 = vmatprep.subr.mxu0 0.0
    %603 = vmatpush2.msra.mxu0 0.0
    %604 = vmatprep.subr.mxu0 0.0
    %605 = vmatpush2.msra.mxu0 0.0
    %606 = vmatprep.subr.mxu0 0.0
    %607 = vmatpush2.msra.mxu0 0.0
    %608 = vmatprep.subr.mxu0 0.0
    %609 = vmatpush2.msra.mxu0 0.0
    %610 = vmatprep.subr.mxu0 0.0
    %611 = vmatpush2.msra.mxu0 0.0
    %612 = vmatprep.subr.mxu0 0.0
    %613 = vmatpush2.msra.mxu0 0.0
    %614 = vmatprep.subr.mxu0 0.0
    %615 = vmatpush2.msra.mxu0 0.0
    %616 = vmatprep.subr.mxu0 0.0
    %617 = vmatpush2.msra.mxu0 0.0
    %618 = vmatprep.subr.mxu0 0.0
    %619 = vmatpush2.msra.mxu0 0.0
    %620 = vmatprep.subr.mxu0 0.0
    %621 = vmatpush2.msra.mxu0 0.0
    %622 = vmatprep.subr.mxu0 0.0
    %623 = vmatpush2.msra.mxu0 0.0
    %624 = vmatprep.subr.mxu0 0.0
    %625 = vmatpush2.msra.mxu0 0.0
    %626 = vmatprep.subr.mxu0 0.0
    %627 = vmatpush2.msra.mxu0 0.0
    %628 = vmatprep.subr.mxu0 0.0
    %629 = vmatpush2.msra.mxu0 0.0
    %630 = vmatprep.subr.mxu0 0.0
    %631 = vmatpush2.msra.mxu0 0.0
    %632 = vmatprep.subr.mxu0 0.0
    %633 = vmatpush2.msra.mxu0 0.0
    %634 = vmatprep.mubr.f32.mxu0 0.0
    %635 = vmatmul.mubr.f32.gmra.mxu0 %v498
    %v636 = vpop.f32.mrf.mxu0
    %v637 = vadd.f32 0.0, %v636
    %v638 = vpop.f32.mrf.mxu0
    %v639 = vadd.f32 0.0, %v638
    %640 = vdwg.mxu0
    %641 = vmatprep.subr.mxu0 0.0
    %642 = vmatpush1.msra.mxu0 %v476
    %643 = vmatprep.subr.mxu0 0.0
    %644 = vmatpush1.msra.mxu0 %v471
    %645 = vmatprep.subr.mxu0 0.0
    %646 = vmatpush1.msra.mxu0 %v466
    %647 = vmatprep.subr.mxu0 0.0
    %648 = vmatpush1.msra.mxu0 %v461
    %649 = vmatprep.subr.mxu0 0.0
    %650 = vmatpush1.msra.mxu0 %v456
    %651 = vmatprep.subr.mxu0 0.0
    %652 = vmatpush1.msra.mxu0 %v451
    %653 = vmatprep.subr.mxu0 0.0
    %654 = vmatpush1.msra.mxu0 %v446
    %655 = vmatprep.subr.mxu0 0.0
    %656 = vmatpush1.msra.mxu0 %v441
    %657 = vmatprep.subr.mxu0 0.0
    %658 = vmatpush1.msra.mxu0 %v436
    %659 = vmatprep.subr.mxu0 0.0
    %660 = vmatpush1.msra.mxu0 %v431
    %661 = vmatprep.subr.mxu0 0.0
    %662 = vmatpush1.msra.mxu0 %v426
    %663 = vmatprep.subr.mxu0 0.0
    %664 = vmatpush1.msra.mxu0 %v421
    %665 = vmatprep.subr.mxu0 0.0
    %666 = vmatpush1.msra.mxu0 %v416
    %667 = vmatprep.subr.mxu0 0.0
    %668 = vmatpush1.msra.mxu0 %v411
    %669 = vmatprep.subr.mxu0 0.0
    %670 = vmatpush1.msra.mxu0 %v406
    %671 = vmatprep.subr.mxu0 0.0
    %672 = vmatpush1.msra.mxu0 %v401
    %673 = vmatprep.subr.mxu0 0.0
    %674 = vmatpush2.msra.mxu0 0.0
    %675 = vmatprep.subr.mxu0 0.0
    %676 = vmatpush2.msra.mxu0 0.0
    %677 = vmatprep.subr.mxu0 0.0
    %678 = vmatpush2.msra.mxu0 0.0
    %679 = vmatprep.subr.mxu0 0.0
    %680 = vmatpush2.msra.mxu0 0.0
    %681 = vmatprep.subr.mxu0 0.0
    %682 = vmatpush2.msra.mxu0 0.0
    %683 = vmatprep.subr.mxu0 0.0
    %684 = vmatpush2.msra.mxu0 0.0
    %685 = vmatprep.subr.mxu0 0.0
    %686 = vmatpush2.msra.mxu0 0.0
    %687 = vmatprep.subr.mxu0 0.0
    %688 = vmatpush2.msra.mxu0 0.0
    %689 = vmatprep.subr.mxu0 0.0
    %690 = vmatpush2.msra.mxu0 0.0
    %691 = vmatprep.subr.mxu0 0.0
    %692 = vmatpush2.msra.mxu0 0.0
    %693 = vmatprep.subr.mxu0 0.0
    %694 = vmatpush2.msra.mxu0 0.0
    %695 = vmatprep.subr.mxu0 0.0
    %696 = vmatpush2.msra.mxu0 0.0
    %697 = vmatprep.subr.mxu0 0.0
    %698 = vmatpush2.msra.mxu0 0.0
    %699 = vmatprep.subr.mxu0 0.0
    %700 = vmatpush2.msra.mxu0 0.0
    %701 = vmatprep.subr.mxu0 0.0
    %702 = vmatpush2.msra.mxu0 0.0
    %703 = vmatprep.subr.mxu0 0.0
    %704 = vmatpush2.msra.mxu0 0.0
    %705 = vmatprep.mubr.f32.mxu0 0.0
    %706 = vmatmul.mubr.f32.gmra.mxu0 %v498
    %v707 = vpop.f32.mrf.mxu0
    %v708 = vadd.f32 0.0, %v707
    %v709 = vpop.f32.mrf.mxu0
    %710 = vdwg.mxu0
    %711 = vst [vmem:[%s4] sm:$0xff] %v708
    %v712 = vld [vmem:[#allocation2 + $0x20] sm:$0xff]
    %v713 = vld [vmem:[#allocation2 + $0x28] sm:$0xff]
    %v714 = vld [vmem:[#allocation2 + $0x30] sm:$0xff]
    %v715 = vld [vmem:[#allocation2 + $0x38] sm:$0xff]
    %v716 = vadd.f32 %v712, %v566
    %v717 = vadd.f32 %v713, %v568
    %v718 = vadd.f32 %v714, %v637
    %v719 = vadd.f32 %v715, %v639
    %v720 = vmul.f32 %v716, 0.5
    %v721 = vtanh.pop %v720
    %v722 = vmul.f32 %v721, 0.5
    %v723 = vadd.f32 %v722, 0.5
    %v724 = vmul.f32 %v717, 0.5
    %v725 = vtanh.pop %v724
    %v726 = vmul.f32 %v725, 0.5
    %v727 = vadd.f32 %v726, 0.5
    %v728 = vtanh.pop %v718
    %v729 = vmul.f32 %v719, 0.5
    %v730 = vtanh.pop %v729
    %v731 = vmul.f32 %v730, 0.5
    %v732 = vadd.f32 %v731, 0.5
    %v733 = vmul.f32 %v727, %v496
    %v734 = vmul.f32 %v723, %v728
    %v735 = vadd.f32 %v733, %v734
    %v736 = vtanh.pop %v735
    %v737 = vmul.f32 %v732, %v736
    %738 = vmatprep.subr.mxu0 %v473
    %739 = vmatpush1.msra.mxu0 %v472
    %740 = vmatprep.subr.mxu0 %v468
    %741 = vmatpush1.msra.mxu0 %v467
    %742 = vmatprep.subr.mxu0 %v463
    %743 = vmatpush1.msra.mxu0 %v462
    %744 = vmatprep.subr.mxu0 %v458
    %745 = vmatpush1.msra.mxu0 %v457
    %746 = vmatprep.subr.mxu0 %v453
    %747 = vmatpush1.msra.mxu0 %v452
    %748 = vmatprep.subr.mxu0 %v448
    %749 = vmatpush1.msra.mxu0 %v447
    %750 = vmatprep.subr.mxu0 %v443
    %751 = vmatpush1.msra.mxu0 %v442
    %752 = vmatprep.subr.mxu0 %v438
    %753 = vmatpush1.msra.mxu0 %v437
    %754 = vmatprep.subr.mxu0 %v433
    %755 = vmatpush1.msra.mxu0 %v432
    %756 = vmatprep.subr.mxu0 %v428
    %757 = vmatpush1.msra.mxu0 %v427
    %758 = vmatprep.subr.mxu0 %v423
    %759 = vmatpush1.msra.mxu0 %v422
    %760 = vmatprep.subr.mxu0 %v418
    %761 = vmatpush1.msra.mxu0 %v417
    %762 = vmatprep.subr.mxu0 %v413
    %763 = vmatpush1.msra.mxu0 %v412
    %764 = vmatprep.subr.mxu0 %v408
    %765 = vmatpush1.msra.mxu0 %v407
    %766 = vmatprep.subr.mxu0 %v403
    %767 = vmatpush1.msra.mxu0 %v402
    %768 = vmatprep.subr.mxu0 %v398
    %769 = vmatpush1.msra.mxu0 %v397
    %770 = vmatprep.subr.mxu0 0.0
    %771 = vmatpush2.msra.mxu0 0.0
    %772 = vmatprep.subr.mxu0 0.0
    %773 = vmatpush2.msra.mxu0 0.0
    %774 = vmatprep.subr.mxu0 0.0
    %775 = vmatpush2.msra.mxu0 0.0
    %776 = vmatprep.subr.mxu0 0.0
    %777 = vmatpush2.msra.mxu0 0.0
    %778 = vmatprep.subr.mxu0 0.0
    %779 = vmatpush2.msra.mxu0 0.0
    %780 = vmatprep.subr.mxu0 0.0
    %781 = vmatpush2.msra.mxu0 0.0
    %782 = vmatprep.subr.mxu0 0.0
    %783 = vmatpush2.msra.mxu0 0.0
    %784 = vmatprep.subr.mxu0 0.0
    %785 = vmatpush2.msra.mxu0 0.0
    %786 = vmatprep.subr.mxu0 0.0
    %787 = vmatpush2.msra.mxu0 0.0
    %788 = vmatprep.subr.mxu0 0.0
    %789 = vmatpush2.msra.mxu0 0.0
    %790 = vmatprep.subr.mxu0 0.0
    %791 = vmatpush2.msra.mxu0 0.0
    %792 = vmatprep.subr.mxu0 0.0
    %793 = vmatpush2.msra.mxu0 0.0
    %794 = vmatprep.subr.mxu0 0.0
    %795 = vmatpush2.msra.mxu0 0.0
    %796 = vmatprep.subr.mxu0 0.0
    %797 = vmatpush2.msra.mxu0 0.0
    %798 = vmatprep.subr.mxu0 0.0
    %799 = vmatpush2.msra.mxu0 0.0
    %800 = vmatprep.subr.mxu0 0.0
    %801 = vmatpush2.msra.mxu0 0.0
    %802 = vmatprep.mubr.f32.mxu0 0.0
    %803 = vmatmul.mubr.f32.gmra.mxu0 %v737
    %v804 = vpop.f32.mrf.mxu0
    %v805 = vadd.f32 0.0, %v804
    %v806 = vpop.f32.mrf.mxu0
    %v807 = vadd.f32 0.0, %v806
    %808 = vdwg.mxu0
    %809 = vmatprep.subr.mxu0 %v475
    %810 = vmatpush1.msra.mxu0 %v474
    %811 = vmatprep.subr.mxu0 %v470
    %812 = vmatpush1.msra.mxu0 %v469
    %813 = vmatprep.subr.mxu0 %v465
    %814 = vmatpush1.msra.mxu0 %v464
    %815 = vmatprep.subr.mxu0 %v460
    %816 = vmatpush1.msra.mxu0 %v459
    %817 = vmatprep.subr.mxu0 %v455
    %818 = vmatpush1.msra.mxu0 %v454
    %819 = vmatprep.subr.mxu0 %v450
    %820 = vmatpush1.msra.mxu0 %v449
    %821 = vmatprep.subr.mxu0 %v445
    %822 = vmatpush1.msra.mxu0 %v444
    %823 = vmatprep.subr.mxu0 %v440
    %824 = vmatpush1.msra.mxu0 %v439
    %825 = vmatprep.subr.mxu0 %v435
    %826 = vmatpush1.msra.mxu0 %v434
    %827 = vmatprep.subr.mxu0 %v430
    %828 = vmatpush1.msra.mxu0 %v429
    %829 = vmatprep.subr.mxu0 %v425
    %830 = vmatpush1.msra.mxu0 %v424
    %831 = vmatprep.subr.mxu0 %v420
    %832 = vmatpush1.msra.mxu0 %v419
    %833 = vmatprep.subr.mxu0 %v415
    %834 = vmatpush1.msra.mxu0 %v414
    %835 = vmatprep.subr.mxu0 %v410
    %836 = vmatpush1.msra.mxu0 %v409
    %837 = vmatprep.subr.mxu0 %v405
    %838 = vmatpush1.msra.mxu0 %v404
    %839 = vmatprep.subr.mxu0 %v400
    %840 = vmatpush1.msra.mxu0 %v399
    %841 = vmatprep.subr.mxu0 0.0
    %842 = vmatpush2.msra.mxu0 0.0
    %843 = vmatprep.subr.mxu0 0.0
    %844 = vmatpush2.msra.mxu0 0.0
    %845 = vmatprep.subr.mxu0 0.0
    %846 = vmatpush2.msra.mxu0 0.0
    %847 = vmatprep.subr.mxu0 0.0
    %848 = vmatpush2.msra.mxu0 0.0
    %849 = vmatprep.subr.mxu0 0.0
    %850 = vmatpush2.msra.mxu0 0.0
    %851 = vmatprep.subr.mxu0 0.0
    %852 = vmatpush2.msra.mxu0 0.0
    %853 = vmatprep.subr.mxu0 0.0
    %854 = vmatpush2.msra.mxu0 0.0
    %855 = vmatprep.subr.mxu0 0.0
    %856 = vmatpush2.msra.mxu0 0.0
    %857 = vmatprep.subr.mxu0 0.0
    %858 = vmatpush2.msra.mxu0 0.0
    %859 = vmatprep.subr.mxu0 0.0
    %860 = vmatpush2.msra.mxu0 0.0
    %861 = vmatprep.subr.mxu0 0.0
    %862 = vmatpush2.msra.mxu0 0.0
    %863 = vmatprep.subr.mxu0 0.0
    %864 = vmatpush2.msra.mxu0 0.0
    %865 = vmatprep.subr.mxu0 0.0
    %866 = vmatpush2.msra.mxu0 0.0
    %867 = vmatprep.subr.mxu0 0.0
    %868 = vmatpush2.msra.mxu0 0.0
    %869 = vmatprep.subr.mxu0 0.0
    %870 = vmatpush2.msra.mxu0 0.0
    %871 = vmatprep.subr.mxu0 0.0
    %872 = vmatpush2.msra.mxu0 0.0
    %873 = vmatprep.mubr.f32.mxu0 0.0
    %874 = vmatmul.mubr.f32.gmra.mxu0 %v737
    %v875 = vpop.f32.mrf.mxu0
    %v876 = vadd.f32 0.0, %v875
    %v877 = vpop.f32.mrf.mxu0
    %v878 = vadd.f32 0.0, %v877
    %879 = vdwg.mxu0
    %880 = vmatprep.subr.mxu0 0.0
    %881 = vmatpush1.msra.mxu0 %v476
    %882 = vmatprep.subr.mxu0 0.0
    %883 = vmatpush1.msra.mxu0 %v471
    %884 = vmatprep.subr.mxu0 0.0
    %885 = vmatpush1.msra.mxu0 %v466
    %886 = vmatprep.subr.mxu0 0.0
    %887 = vmatpush1.msra.mxu0 %v461
    %888 = vmatprep.subr.mxu0 0.0
    %889 = vmatpush1.msra.mxu0 %v456
    %890 = vmatprep.subr.mxu0 0.0
    %891 = vmatpush1.msra.mxu0 %v451
    %892 = vmatprep.subr.mxu0 0.0
    %893 = vmatpush1.msra.mxu0 %v446
    %894 = vmatprep.subr.mxu0 0.0
    %895 = vmatpush1.msra.mxu0 %v441
    %896 = vmatprep.subr.mxu0 0.0
    %897 = vmatpush1.msra.mxu0 %v436
    %898 = vmatprep.subr.mxu0 0.0
    %899 = vmatpush1.msra.mxu0 %v431
    %900 = vmatprep.subr.mxu0 0.0
    %901 = vmatpush1.msra.mxu0 %v426
    %902 = vmatprep.subr.mxu0 0.0
    %903 = vmatpush1.msra.mxu0 %v421
    %904 = vmatprep.subr.mxu0 0.0
    %905 = vmatpush1.msra.mxu0 %v416
    %906 = vmatprep.subr.mxu0 0.0
    %907 = vmatpush1.msra.mxu0 %v411
    %908 = vmatprep.subr.mxu0 0.0
    %909 = vmatpush1.msra.mxu0 %v406
    %910 = vmatprep.subr.mxu0 0.0
    %911 = vmatpush1.msra.mxu0 %v401
    %912 = vmatprep.subr.mxu0 0.0
    %913 = vmatpush2.msra.mxu0 0.0
    %914 = vmatprep.subr.mxu0 0.0
    %915 = vmatpush2.msra.mxu0 0.0
    %916 = vmatprep.subr.mxu0 0.0
    %917 = vmatpush2.msra.mxu0 0.0
    %918 = vmatprep.subr.mxu0 0.0
    %919 = vmatpush2.msra.mxu0 0.0
    %920 = vmatprep.subr.mxu0 0.0
    %921 = vmatpush2.msra.mxu0 0.0
    %922 = vmatprep.subr.mxu0 0.0
    %923 = vmatpush2.msra.mxu0 0.0
    %924 = vmatprep.subr.mxu0 0.0
    %925 = vmatpush2.msra.mxu0 0.0
    %926 = vmatprep.subr.mxu0 0.0
    %927 = vmatpush2.msra.mxu0 0.0
    %928 = vmatprep.subr.mxu0 0.0
    %929 = vmatpush2.msra.mxu0 0.0
    %930 = vmatprep.subr.mxu0 0.0
    %931 = vmatpush2.msra.mxu0 0.0
    %932 = vmatprep.subr.mxu0 0.0
    %933 = vmatpush2.msra.mxu0 0.0
    %934 = vmatprep.subr.mxu0 0.0
    %935 = vmatpush2.msra.mxu0 0.0
    %936 = vmatprep.subr.mxu0 0.0
    %937 = vmatpush2.msra.mxu0 0.0
    %938 = vmatprep.subr.mxu0 0.0
    %939 = vmatpush2.msra.mxu0 0.0
    %940 = vmatprep.subr.mxu0 0.0
    %941 = vmatpush2.msra.mxu0 0.0
    %942 = vmatprep.subr.mxu0 0.0
    %943 = vmatpush2.msra.mxu0 0.0
    %944 = vmatprep.mubr.f32.mxu0 0.0
    %945 = vmatmul.mubr.f32.gmra.mxu0 %v737
    %v946 = vpop.f32.mrf.mxu0
    %v947 = vadd.f32 0.0, %v946
    %v948 = vpop.f32.mrf.mxu0
    %949 = vdwg.mxu0
    %950 = vst [vmem:[%s4 + $0x8] sm:$0xff] %v947
    %v951 = vld [vmem:[#allocation2 + $0x40] sm:$0xff]
    %v952 = vld [vmem:[#allocation2 + $0x48] sm:$0xff]
    %v953 = vld [vmem:[#allocation2 + $0x50] sm:$0xff]
    %v954 = vld [vmem:[#allocation2 + $0x58] sm:$0xff]
    %v955 = vadd.f32 %v951, %v805
    %v956 = vadd.f32 %v952, %v807
    %v957 = vadd.f32 %v953, %v876
    %v958 = vadd.f32 %v954, %v878
    %v959 = vmul.f32 %v955, 0.5
    %v960 = vtanh.pop %v959
    %v961 = vmul.f32 %v960, 0.5
    %v962 = vadd.f32 %v961, 0.5
    %v963 = vmul.f32 %v956, 0.5
    %v964 = vtanh.pop %v963
    %v965 = vmul.f32 %v964, 0.5
    %v966 = vadd.f32 %v965, 0.5
    %v967 = vtanh.pop %v957
    %v968 = vmul.f32 %v958, 0.5
    %v969 = vtanh.pop %v968
    %v970 = vmul.f32 %v969, 0.5
    %v971 = vadd.f32 %v970, 0.5
    %v972 = vmul.f32 %v966, %v735
    %v973 = vmul.f32 %v962, %v967
    %v974 = vadd.f32 %v972, %v973
    %v975 = vtanh.pop %v974
    %v976 = vmul.f32 %v971, %v975
    %977 = vmatprep.subr.mxu0 %v473
    %978 = vmatpush1.msra.mxu0 %v472
    %979 = vmatprep.subr.mxu0 %v468
    %980 = vmatpush1.msra.mxu0 %v467
    %981 = vmatprep.subr.mxu0 %v463
    %982 = vmatpush1.msra.mxu0 %v462
    %983 = vmatprep.subr.mxu0 %v458
    %984 = vmatpush1.msra.mxu0 %v457
    %985 = vmatprep.subr.mxu0 %v453
    %986 = vmatpush1.msra.mxu0 %v452
    %987 = vmatprep.subr.mxu0 %v448
    %988 = vmatpush1.msra.mxu0 %v447
    %989 = vmatprep.subr.mxu0 %v443
    %990 = vmatpush1.msra.mxu0 %v442
    %991 = vmatprep.subr.mxu0 %v438
    %992 = vmatpush1.msra.mxu0 %v437
    %993 = vmatprep.subr.mxu0 %v433
    %994 = vmatpush1.msra.mxu0 %v432
    %995 = vmatprep.subr.mxu0 %v428
    %996 = vmatpush1.msra.mxu0 %v427
    %997 = vmatprep.subr.mxu0 %v423
    %998 = vmatpush1.msra.mxu0 %v422
    %999 = vmatprep.subr.mxu0 %v418
    %1000 = vmatpush1.msra.mxu0 %v417
    %1001 = vmatprep.subr.mxu0 %v413
    %1002 = vmatpush1.msra.mxu0 %v412
    %1003 = vmatprep.subr.mxu0 %v408
    %1004 = vmatpush1.msra.mxu0 %v407
    %1005 = vmatprep.subr.mxu0 %v403
    %1006 = vmatpush1.msra.mxu0 %v402
    %1007 = vmatprep.subr.mxu0 %v398
    %1008 = vmatpush1.msra.mxu0 %v397
    %1009 = vmatprep.subr.mxu0 0.0
    %1010 = vmatpush2.msra.mxu0 0.0
    %1011 = vmatprep.subr.mxu0 0.0
    %1012 = vmatpush2.msra.mxu0 0.0
    %1013 = vmatprep.subr.mxu0 0.0
    %1014 = vmatpush2.msra.mxu0 0.0
    %1015 = vmatprep.subr.mxu0 0.0
    %1016 = vmatpush2.msra.mxu0 0.0
    %1017 = vmatprep.subr.mxu0 0.0
    %1018 = vmatpush2.msra.mxu0 0.0
    %1019 = vmatprep.subr.mxu0 0.0
    %1020 = vmatpush2.msra.mxu0 0.0
    %1021 = vmatprep.subr.mxu0 0.0
    %1022 = vmatpush2.msra.mxu0 0.0
    %1023 = vmatprep.subr.mxu0 0.0
    %1024 = vmatpush2.msra.mxu0 0.0
    %1025 = vmatprep.subr.mxu0 0.0
    %1026 = vmatpush2.msra.mxu0 0.0
    %1027 = vmatprep.subr.mxu0 0.0
    %1028 = vmatpush2.msra.mxu0 0.0
    %1029 = vmatprep.subr.mxu0 0.0
    %1030 = vmatpush2.msra.mxu0 0.0
    %1031 = vmatprep.subr.mxu0 0.0
    %1032 = vmatpush2.msra.mxu0 0.0
    %1033 = vmatprep.subr.mxu0 0.0
    %1034 = vmatpush2.msra.mxu0 0.0
    %1035 = vmatprep.subr.mxu0 0.0
    %1036 = vmatpush2.msra.mxu0 0.0
    %1037 = vmatprep.subr.mxu0 0.0
    %1038 = vmatpush2.msra.mxu0 0.0
    %1039 = vmatprep.subr.mxu0 0.0
    %1040 = vmatpush2.msra.mxu0 0.0
    %1041 = vmatprep.mubr.f32.mxu0 0.0
    %1042 = vmatmul.mubr.f32.gmra.mxu0 %v976
    %v1043 = vpop.f32.mrf.mxu0
    %v1044 = vadd.f32 0.0, %v1043
    %v1045 = vpop.f32.mrf.mxu0
    %v1046 = vadd.f32 0.0, %v1045
    %1047 = vdwg.mxu0
    %1048 = vmatprep.subr.mxu0 %v475
    %1049 = vmatpush1.msra.mxu0 %v474
    %1050 = vmatprep.subr.mxu0 %v470
    %1051 = vmatpush1.msra.mxu0 %v469
    %1052 = vmatprep.subr.mxu0 %v465
    %1053 = vmatpush1.msra.mxu0 %v464
    %1054 = vmatprep.subr.mxu0 %v460
    %1055 = vmatpush1.msra.mxu0 %v459
    %1056 = vmatprep.subr.mxu0 %v455
    %1057 = vmatpush1.msra.mxu0 %v454
    %1058 = vmatprep.subr.mxu0 %v450
    %1059 = vmatpush1.msra.mxu0 %v449
    %1060 = vmatprep.subr.mxu0 %v445
    %1061 = vmatpush1.msra.mxu0 %v444
    %1062 = vmatprep.subr.mxu0 %v440
    %1063 = vmatpush1.msra.mxu0 %v439
    %1064 = vmatprep.subr.mxu0 %v435
    %1065 = vmatpush1.msra.mxu0 %v434
    %1066 = vmatprep.subr.mxu0 %v430
    %1067 = vmatpush1.msra.mxu0 %v429
    %1068 = vmatprep.subr.mxu0 %v425
    %1069 = vmatpush1.msra.mxu0 %v424
    %1070 = vmatprep.subr.mxu0 %v420
    %1071 = vmatpush1.msra.mxu0 %v419
    %1072 = vmatprep.subr.mxu0 %v415
    %1073 = vmatpush1.msra.mxu0 %v414
    %1074 = vmatprep.subr.mxu0 %v410
    %1075 = vmatpush1.msra.mxu0 %v409
    %1076 = vmatprep.subr.mxu0 %v405
    %1077 = vmatpush1.msra.mxu0 %v404
    %1078 = vmatprep.subr.mxu0 %v400
    %1079 = vmatpush1.msra.mxu0 %v399
    %1080 = vmatprep.subr.mxu0 0.0
    %1081 = vmatpush2.msra.mxu0 0.0
    %1082 = vmatprep.subr.mxu0 0.0
    %1083 = vmatpush2.msra.mxu0 0.0
    %1084 = vmatprep.subr.mxu0 0.0
    %1085 = vmatpush2.msra.mxu0 0.0
    %1086 = vmatprep.subr.mxu0 0.0
    %1087 = vmatpush2.msra.mxu0 0.0
    %1088 = vmatprep.subr.mxu0 0.0
    %1089 = vmatpush2.msra.mxu0 0.0
    %1090 = vmatprep.subr.mxu0 0.0
    %1091 = vmatpush2.msra.mxu0 0.0
    %1092 = vmatprep.subr.mxu0 0.0
    %1093 = vmatpush2.msra.mxu0 0.0
    %1094 = vmatprep.subr.mxu0 0.0
    %1095 = vmatpush2.msra.mxu0 0.0
    %1096 = vmatprep.subr.mxu0 0.0
    %1097 = vmatpush2.msra.mxu0 0.0
    %1098 = vmatprep.subr.mxu0 0.0
    %1099 = vmatpush2.msra.mxu0 0.0
    %1100 = vmatprep.subr.mxu0 0.0
    %1101 = vmatpush2.msra.mxu0 0.0
    %1102 = vmatprep.subr.mxu0 0.0
    %1103 = vmatpush2.msra.mxu0 0.0
    %1104 = vmatprep.subr.mxu0 0.0
    %1105 = vmatpush2.msra.mxu0 0.0
    %1106 = vmatprep.subr.mxu0 0.0
    %1107 = vmatpush2.msra.mxu0 0.0
    %1108 = vmatprep.subr.mxu0 0.0
    %1109 = vmatpush2.msra.mxu0 0.0
    %1110 = vmatprep.subr.mxu0 0.0
    %1111 = vmatpush2.msra.mxu0 0.0
    %1112 = vmatprep.mubr.f32.mxu0 0.0
    %1113 = vmatmul.mubr.f32.gmra.mxu0 %v976
    %v1114 = vpop.f32.mrf.mxu0
    %v1115 = vadd.f32 0.0, %v1114
    %v1116 = vpop.f32.mrf.mxu0
    %v1117 = vadd.f32 0.0, %v1116
    %1118 = vdwg.mxu0
    %1119 = vmatprep.subr.mxu0 0.0
    %1120 = vmatpush1.msra.mxu0 %v476
    %1121 = vmatprep.subr.mxu0 0.0
    %1122 = vmatpush1.msra.mxu0 %v471
    %1123 = vmatprep.subr.mxu0 0.0
    %1124 = vmatpush1.msra.mxu0 %v466
    %1125 = vmatprep.subr.mxu0 0.0
    %1126 = vmatpush1.msra.mxu0 %v461
    %1127 = vmatprep.subr.mxu0 0.0
    %1128 = vmatpush1.msra.mxu0 %v456
    %1129 = vmatprep.subr.mxu0 0.0
    %1130 = vmatpush1.msra.mxu0 %v451
    %1131 = vmatprep.subr.mxu0 0.0
    %1132 = vmatpush1.msra.mxu0 %v446
    %1133 = vmatprep.subr.mxu0 0.0
    %1134 = vmatpush1.msra.mxu0 %v441
    %1135 = vmatprep.subr.mxu0 0.0
    %1136 = vmatpush1.msra.mxu0 %v436
    %1137 = vmatprep.subr.mxu0 0.0
    %1138 = vmatpush1.msra.mxu0 %v431
    %1139 = vmatprep.subr.mxu0 0.0
    %1140 = vmatpush1.msra.mxu0 %v426
    %1141 = vmatprep.subr.mxu0 0.0
    %1142 = vmatpush1.msra.mxu0 %v421
    %1143 = vmatprep.subr.mxu0 0.0
    %1144 = vmatpush1.msra.mxu0 %v416
    %1145 = vmatprep.subr.mxu0 0.0
    %1146 = vmatpush1.msra.mxu0 %v411
    %1147 = vmatprep.subr.mxu0 0.0
    %1148 = vmatpush1.msra.mxu0 %v406
    %1149 = vmatprep.subr.mxu0 0.0
    %1150 = vmatpush1.msra.mxu0 %v401
    %1151 = vmatprep.subr.mxu0 0.0
    %1152 = vmatpush2.msra.mxu0 0.0
    %1153 = vmatprep.subr.mxu0 0.0
    %1154 = vmatpush2.msra.mxu0 0.0
    %1155 = vmatprep.subr.mxu0 0.0
    %1156 = vmatpush2.msra.mxu0 0.0
    %1157 = vmatprep.subr.mxu0 0.0
    %1158 = vmatpush2.msra.mxu0 0.0
    %1159 = vmatprep.subr.mxu0 0.0
    %1160 = vmatpush2.msra.mxu0 0.0
    %1161 = vmatprep.subr.mxu0 0.0
    %1162 = vmatpush2.msra.mxu0 0.0
    %1163 = vmatprep.subr.mxu0 0.0
    %1164 = vmatpush2.msra.mxu0 0.0
    %1165 = vmatprep.subr.mxu0 0.0
    %1166 = vmatpush2.msra.mxu0 0.0
    %1167 = vmatprep.subr.mxu0 0.0
    %1168 = vmatpush2.msra.mxu0 0.0
    %1169 = vmatprep.subr.mxu0 0.0
    %1170 = vmatpush2.msra.mxu0 0.0
    %1171 = vmatprep.subr.mxu0 0.0
    %1172 = vmatpush2.msra.mxu0 0.0
    %1173 = vmatprep.subr.mxu0 0.0
    %1174 = vmatpush2.msra.mxu0 0.0
    %1175 = vmatprep.subr.mxu0 0.0
    %1176 = vmatpush2.msra.mxu0 0.0
    %1177 = vmatprep.subr.mxu0 0.0
    %1178 = vmatpush2.msra.mxu0 0.0
    %1179 = vmatprep.subr.mxu0 0.0
    %1180 = vmatpush2.msra.mxu0 0.0
    %1181 = vmatprep.subr.mxu0 0.0
    %1182 = vmatpush2.msra.mxu0 0.0
    %1183 = vmatprep.mubr.f32.mxu0 0.0
    %1184 = vmatmul.mubr.f32.gmra.mxu0 %v976
    %v1185 = vpop.f32.mrf.mxu0
    %v1186 = vadd.f32 0.0, %v1185
    %v1187 = vpop.f32.mrf.mxu0
    %1188 = vdwg.mxu0
    %1189 = vst [vmem:[%s4 + $0x10] sm:$0xff] %v1186
    %v1190 = vld [vmem:[#allocation2 + $0x60] sm:$0xff]
    %v1191 = vld [vmem:[#allocation2 + $0x68] sm:$0xff]
    %v1192 = vld [vmem:[#allocation2 + $0x70] sm:$0xff]
    %v1193 = vld [vmem:[#allocation2 + $0x78] sm:$0xff]
    %v1194 = vadd.f32 %v1190, %v1044
    %v1195 = vadd.f32 %v1191, %v1046
    %v1196 = vadd.f32 %v1192, %v1115
    %v1197 = vadd.f32 %v1193, %v1117
    %v1198 = vmul.f32 %v1194, 0.5
    %v1199 = vtanh.pop %v1198
    %v1200 = vmul.f32 %v1199, 0.5
    %v1201 = vadd.f32 %v1200, 0.5
    %v1202 = vmul.f32 %v1195, 0.5
    %v1203 = vtanh.pop %v1202
    %v1204 = vmul.f32 %v1203, 0.5
    %v1205 = vadd.f32 %v1204, 0.5
    %v1206 = vtanh.pop %v1196
    %v1207 = vmul.f32 %v1197, 0.5
    %v1208 = vtanh.pop %v1207
    %v1209 = vmul.f32 %v1208, 0.5
    %v1210 = vadd.f32 %v1209, 0.5
    %v1211 = vmul.f32 %v1205, %v974
    %v1212 = vmul.f32 %v1201, %v1206
    %v1213 = vadd.f32 %v1211, %v1212
    %v1214 = vtanh.pop %v1213
    %v1215 = vmul.f32 %v1210, %v1214
    %1216 = vmatprep.subr.mxu0 %v473
    %1217 = vmatpush1.msra.mxu0 %v472
    %1218 = vmatprep.subr.mxu0 %v468
    %1219 = vmatpush1.msra.mxu0 %v467
    %1220 = vmatprep.subr.mxu0 %v463
    %1221 = vmatpush1.msra.mxu0 %v462
    %1222 = vmatprep.subr.mxu0 %v458
    %1223 = vmatpush1.msra.mxu0 %v457
    %1224 = vmatprep.subr.mxu0 %v453
    %1225 = vmatpush1.msra.mxu0 %v452
    %1226 = vmatprep.subr.mxu0 %v448
    %1227 = vmatpush1.msra.mxu0 %v447
    %1228 = vmatprep.subr.mxu0 %v443
    %1229 = vmatpush1.msra.mxu0 %v442
    %1230 = vmatprep.subr.mxu0 %v438
    %1231 = vmatpush1.msra.mxu0 %v437
    %1232 = vmatprep.subr.mxu0 %v433
    %1233 = vmatpush1.msra.mxu0 %v432
    %1234 = vmatprep.subr.mxu0 %v428
    %1235 = vmatpush1.msra.mxu0 %v427
    %1236 = vmatprep.subr.mxu0 %v423
    %1237 = vmatpush1.msra.mxu0 %v422
    %1238 = vmatprep.subr.mxu0 %v418
    %1239 = vmatpush1.msra.mxu0 %v417
    %1240 = vmatprep.subr.mxu0 %v413
    %1241 = vmatpush1.msra.mxu0 %v412
    %1242 = vmatprep.subr.mxu0 %v408
    %1243 = vmatpush1.msra.mxu0 %v407
    %1244 = vmatprep.subr.mxu0 %v403
    %1245 = vmatpush1.msra.mxu0 %v402
    %1246 = vmatprep.subr.mxu0 %v398
    %1247 = vmatpush1.msra.mxu0 %v397
    %1248 = vmatprep.subr.mxu0 0.0
    %1249 = vmatpush2.msra.mxu0 0.0
    %1250 = vmatprep.subr.mxu0 0.0
    %1251 = vmatpush2.msra.mxu0 0.0
    %1252 = vmatprep.subr.mxu0 0.0
    %1253 = vmatpush2.msra.mxu0 0.0
    %1254 = vmatprep.subr.mxu0 0.0
    %1255 = vmatpush2.msra.mxu0 0.0
    %1256 = vmatprep.subr.mxu0 0.0
    %1257 = vmatpush2.msra.mxu0 0.0
    %1258 = vmatprep.subr.mxu0 0.0
    %1259 = vmatpush2.msra.mxu0 0.0
    %1260 = vmatprep.subr.mxu0 0.0
    %1261 = vmatpush2.msra.mxu0 0.0
    %1262 = vmatprep.subr.mxu0 0.0
    %1263 = vmatpush2.msra.mxu0 0.0
    %1264 = vmatprep.subr.mxu0 0.0
    %1265 = vmatpush2.msra.mxu0 0.0
    %1266 = vmatprep.subr.mxu0 0.0
    %1267 = vmatpush2.msra.mxu0 0.0
    %1268 = vmatprep.subr.mxu0 0.0
    %1269 = vmatpush2.msra.mxu0 0.0
    %1270 = vmatprep.subr.mxu0 0.0
    %1271 = vmatpush2.msra.mxu0 0.0
    %1272 = vmatprep.subr.mxu0 0.0
    %1273 = vmatpush2.msra.mxu0 0.0
    %1274 = vmatprep.subr.mxu0 0.0
    %1275 = vmatpush2.msra.mxu0 0.0
    %1276 = vmatprep.subr.mxu0 0.0
    %1277 = vmatpush2.msra.mxu0 0.0
    %1278 = vmatprep.subr.mxu0 0.0
    %1279 = vmatpush2.msra.mxu0 0.0
    %1280 = vmatprep.mubr.f32.mxu0 0.0
    %1281 = vmatmul.mubr.f32.gmra.mxu0 %v1215
    %v1282 = vpop.f32.mrf.mxu0
    %v1283 = vadd.f32 0.0, %v1282
    %v1284 = vpop.f32.mrf.mxu0
    %v1285 = vadd.f32 0.0, %v1284
    %1286 = vdwg.mxu0
    %1287 = vmatprep.subr.mxu0 %v475
    %1288 = vmatpush1.msra.mxu0 %v474
    %1289 = vmatprep.subr.mxu0 %v470
    %1290 = vmatpush1.msra.mxu0 %v469
    %1291 = vmatprep.subr.mxu0 %v465
    %1292 = vmatpush1.msra.mxu0 %v464
    %1293 = vmatprep.subr.mxu0 %v460
    %1294 = vmatpush1.msra.mxu0 %v459
    %1295 = vmatprep.subr.mxu0 %v455
    %1296 = vmatpush1.msra.mxu0 %v454
    %1297 = vmatprep.subr.mxu0 %v450
    %1298 = vmatpush1.msra.mxu0 %v449
    %1299 = vmatprep.subr.mxu0 %v445
    %1300 = vmatpush1.msra.mxu0 %v444
    %1301 = vmatprep.subr.mxu0 %v440
    %1302 = vmatpush1.msra.mxu0 %v439
    %1303 = vmatprep.subr.mxu0 %v435
    %1304 = vmatpush1.msra.mxu0 %v434
    %1305 = vmatprep.subr.mxu0 %v430
    %1306 = vmatpush1.msra.mxu0 %v429
    %1307 = vmatprep.subr.mxu0 %v425
    %1308 = vmatpush1.msra.mxu0 %v424
    %1309 = vmatprep.subr.mxu0 %v420
    %1310 = vmatpush1.msra.mxu0 %v419
    %1311 = vmatprep.subr.mxu0 %v415
    %1312 = vmatpush1.msra.mxu0 %v414
    %1313 = vmatprep.subr.mxu0 %v410
    %1314 = vmatpush1.msra.mxu0 %v409
    %1315 = vmatprep.subr.mxu0 %v405
    %1316 = vmatpush1.msra.mxu0 %v404
    %1317 = vmatprep.subr.mxu0 %v400
    %1318 = vmatpush1.msra.mxu0 %v399
    %1319 = vmatprep.subr.mxu0 0.0
    %1320 = vmatpush2.msra.mxu0 0.0
    %1321 = vmatprep.subr.mxu0 0.0
    %1322 = vmatpush2.msra.mxu0 0.0
    %1323 = vmatprep.subr.mxu0 0.0
    %1324 = vmatpush2.msra.mxu0 0.0
    %1325 = vmatprep.subr.mxu0 0.0
    %1326 = vmatpush2.msra.mxu0 0.0
    %1327 = vmatprep.subr.mxu0 0.0
    %1328 = vmatpush2.msra.mxu0 0.0
    %1329 = vmatprep.subr.mxu0 0.0
    %1330 = vmatpush2.msra.mxu0 0.0
    %1331 = vmatprep.subr.mxu0 0.0
    %1332 = vmatpush2.msra.mxu0 0.0
    %1333 = vmatprep.subr.mxu0 0.0
    %1334 = vmatpush2.msra.mxu0 0.0
    %1335 = vmatprep.subr.mxu0 0.0
    %1336 = vmatpush2.msra.mxu0 0.0
    %1337 = vmatprep.subr.mxu0 0.0
    %1338 = vmatpush2.msra.mxu0 0.0
    %1339 = vmatprep.subr.mxu0 0.0
    %1340 = vmatpush2.msra.mxu0 0.0
    %1341 = vmatprep.subr.mxu0 0.0
    %1342 = vmatpush2.msra.mxu0 0.0
    %1343 = vmatprep.subr.mxu0 0.0
    %1344 = vmatpush2.msra.mxu0 0.0
    %1345 = vmatprep.subr.mxu0 0.0
    %1346 = vmatpush2.msra.mxu0 0.0
    %1347 = vmatprep.subr.mxu0 0.0
    %1348 = vmatpush2.msra.mxu0 0.0
    %1349 = vmatprep.subr.mxu0 0.0
    %1350 = vmatpush2.msra.mxu0 0.0
    %1351 = vmatprep.mubr.f32.mxu0 0.0
    %1352 = vmatmul.mubr.f32.gmra.mxu0 %v1215
    %v1353 = vpop.f32.mrf.mxu0
    %v1354 = vadd.f32 0.0, %v1353
    %v1355 = vpop.f32.mrf.mxu0
    %v1356 = vadd.f32 0.0, %v1355
    %1357 = vdwg.mxu0
    %1358 = vmatprep.subr.mxu0 0.0
    %1359 = vmatpush1.msra.mxu0 %v476
    %1360 = vmatprep.subr.mxu0 0.0
    %1361 = vmatpush1.msra.mxu0 %v471
    %1362 = vmatprep.subr.mxu0 0.0
    %1363 = vmatpush1.msra.mxu0 %v466
    %1364 = vmatprep.subr.mxu0 0.0
    %1365 = vmatpush1.msra.mxu0 %v461
    %1366 = vmatprep.subr.mxu0 0.0
    %1367 = vmatpush1.msra.mxu0 %v456
    %1368 = vmatprep.subr.mxu0 0.0
    %1369 = vmatpush1.msra.mxu0 %v451
    %1370 = vmatprep.subr.mxu0 0.0
    %1371 = vmatpush1.msra.mxu0 %v446
    %1372 = vmatprep.subr.mxu0 0.0
    %1373 = vmatpush1.msra.mxu0 %v441
    %1374 = vmatprep.subr.mxu0 0.0
    %1375 = vmatpush1.msra.mxu0 %v436
    %1376 = vmatprep.subr.mxu0 0.0
    %1377 = vmatpush1.msra.mxu0 %v431
    %1378 = vmatprep.subr.mxu0 0.0
    %1379 = vmatpush1.msra.mxu0 %v426
    %1380 = vmatprep.subr.mxu0 0.0
    %1381 = vmatpush1.msra.mxu0 %v421
    %1382 = vmatprep.subr.mxu0 0.0
    %1383 = vmatpush1.msra.mxu0 %v416
    %1384 = vmatprep.subr.mxu0 0.0
    %1385 = vmatpush1.msra.mxu0 %v411
    %1386 = vmatprep.subr.mxu0 0.0
    %1387 = vmatpush1.msra.mxu0 %v406
    %1388 = vmatprep.subr.mxu0 0.0
    %1389 = vmatpush1.msra.mxu0 %v401
    %1390 = vmatprep.subr.mxu0 0.0
    %1391 = vmatpush2.msra.mxu0 0.0
    %1392 = vmatprep.subr.mxu0 0.0
    %1393 = vmatpush2.msra.mxu0 0.0
    %1394 = vmatprep.subr.mxu0 0.0
    %1395 = vmatpush2.msra.mxu0 0.0
    %1396 = vmatprep.subr.mxu0 0.0
    %1397 = vmatpush2.msra.mxu0 0.0
    %1398 = vmatprep.subr.mxu0 0.0
    %1399 = vmatpush2.msra.mxu0 0.0
    %1400 = vmatprep.subr.mxu0 0.0
    %1401 = vmatpush2.msra.mxu0 0.0
    %1402 = vmatprep.subr.mxu0 0.0
    %1403 = vmatpush2.msra.mxu0 0.0
    %1404 = vmatprep.subr.mxu0 0.0
    %1405 = vmatpush2.msra.mxu0 0.0
    %1406 = vmatprep.subr.mxu0 0.0
    %1407 = vmatpush2.msra.mxu0 0.0
    %1408 = vmatprep.subr.mxu0 0.0
    %1409 = vmatpush2.msra.mxu0 0.0
    %1410 = vmatprep.subr.mxu0 0.0
    %1411 = vmatpush2.msra.mxu0 0.0
    %1412 = vmatprep.subr.mxu0 0.0
    %1413 = vmatpush2.msra.mxu0 0.0
    %1414 = vmatprep.subr.mxu0 0.0
    %1415 = vmatpush2.msra.mxu0 0.0
    %1416 = vmatprep.subr.mxu0 0.0
    %1417 = vmatpush2.msra.mxu0 0.0
    %1418 = vmatprep.subr.mxu0 0.0
    %1419 = vmatpush2.msra.mxu0 0.0
    %1420 = vmatprep.subr.mxu0 0.0
    %1421 = vmatpush2.msra.mxu0 0.0
    %1422 = vmatprep.mubr.f32.mxu0 0.0
    %1423 = vmatmul.mubr.f32.gmra.mxu0 %v1215
    %v1424 = vpop.f32.mrf.mxu0
    %v1425 = vadd.f32 0.0, %v1424
    %v1426 = vpop.f32.mrf.mxu0
    %1427 = vdwg.mxu0
    %1428 = vst [vmem:[%s4 + $0x18] sm:$0xff] %v1425
    %v1429 = vld [vmem:[#allocation2 + $0x80] sm:$0xff]
    %v1430 = vld [vmem:[#allocation2 + $0x88] sm:$0xff]
    %v1431 = vld [vmem:[#allocation2 + $0x90] sm:$0xff]
    %v1432 = vld [vmem:[#allocation2 + $0x98] sm:$0xff]
    %v1433 = vadd.f32 %v1429, %v1283
    %v1434 = vadd.f32 %v1430, %v1285
    %v1435 = vadd.f32 %v1431, %v1354
    %v1436 = vadd.f32 %v1432, %v1356
    %v1437 = vmul.f32 %v1433, 0.5
    %v1438 = vtanh.pop %v1437
    %v1439 = vmul.f32 %v1438, 0.5
    %v1440 = vadd.f32 %v1439, 0.5
    %v1441 = vmul.f32 %v1434, 0.5
    %v1442 = vtanh.pop %v1441
    %v1443 = vmul.f32 %v1442, 0.5
    %v1444 = vadd.f32 %v1443, 0.5
    %v1445 = vtanh.pop %v1435
    %v1446 = vmul.f32 %v1436, 0.5
    %v1447 = vtanh.pop %v1446
    %v1448 = vmul.f32 %v1447, 0.5
    %v1449 = vadd.f32 %v1448, 0.5
    %v1450 = vmul.f32 %v1444, %v1213
    %v1451 = vmul.f32 %v1440, %v1445
    %v1452 = vadd.f32 %v1450, %v1451
    %v1453 = vtanh.pop %v1452
    %v1454 = vmul.f32 %v1449, %v1453
    %1455 = vmatprep.subr.mxu0 %v473
    %1456 = vmatpush1.msra.mxu0 %v472
    %1457 = vmatprep.subr.mxu0 %v468
    %1458 = vmatpush1.msra.mxu0 %v467
    %1459 = vmatprep.subr.mxu0 %v463
    %1460 = vmatpush1.msra.mxu0 %v462
    %1461 = vmatprep.subr.mxu0 %v458
    %1462 = vmatpush1.msra.mxu0 %v457
    %1463 = vmatprep.subr.mxu0 %v453
    %1464 = vmatpush1.msra.mxu0 %v452
    %1465 = vmatprep.subr.mxu0 %v448
    %1466 = vmatpush1.msra.mxu0 %v447
    %1467 = vmatprep.subr.mxu0 %v443
    %1468 = vmatpush1.msra.mxu0 %v442
    %1469 = vmatprep.subr.mxu0 %v438
    %1470 = vmatpush1.msra.mxu0 %v437
    %1471 = vmatprep.subr.mxu0 %v433
    %1472 = vmatpush1.msra.mxu0 %v432
    %1473 = vmatprep.subr.mxu0 %v428
    %1474 = vmatpush1.msra.mxu0 %v427
    %1475 = vmatprep.subr.mxu0 %v423
    %1476 = vmatpush1.msra.mxu0 %v422
    %1477 = vmatprep.subr.mxu0 %v418
    %1478 = vmatpush1.msra.mxu0 %v417
    %1479 = vmatprep.subr.mxu0 %v413
    %1480 = vmatpush1.msra.mxu0 %v412
    %1481 = vmatprep.subr.mxu0 %v408
    %1482 = vmatpush1.msra.mxu0 %v407
    %1483 = vmatprep.subr.mxu0 %v403
    %1484 = vmatpush1.msra.mxu0 %v402
    %1485 = vmatprep.subr.mxu0 %v398
    %1486 = vmatpush1.msra.mxu0 %v397
    %1487 = vmatprep.subr.mxu0 0.0
    %1488 = vmatpush2.msra.mxu0 0.0
    %1489 = vmatprep.subr.mxu0 0.0
    %1490 = vmatpush2.msra.mxu0 0.0
    %1491 = vmatprep.subr.mxu0 0.0
    %1492 = vmatpush2.msra.mxu0 0.0
    %1493 = vmatprep.subr.mxu0 0.0
    %1494 = vmatpush2.msra.mxu0 0.0
    %1495 = vmatprep.subr.mxu0 0.0
    %1496 = vmatpush2.msra.mxu0 0.0
    %1497 = vmatprep.subr.mxu0 0.0
    %1498 = vmatpush2.msra.mxu0 0.0
    %1499 = vmatprep.subr.mxu0 0.0
    %1500 = vmatpush2.msra.mxu0 0.0
    %1501 = vmatprep.subr.mxu0 0.0
    %1502 = vmatpush2.msra.mxu0 0.0
    %1503 = vmatprep.subr.mxu0 0.0
    %1504 = vmatpush2.msra.mxu0 0.0
    %1505 = vmatprep.subr.mxu0 0.0
    %1506 = vmatpush2.msra.mxu0 0.0
    %1507 = vmatprep.subr.mxu0 0.0
    %1508 = vmatpush2.msra.mxu0 0.0
    %1509 = vmatprep.subr.mxu0 0.0
    %1510 = vmatpush2.msra.mxu0 0.0
    %1511 = vmatprep.subr.mxu0 0.0
    %1512 = vmatpush2.msra.mxu0 0.0
    %1513 = vmatprep.subr.mxu0 0.0
    %1514 = vmatpush2.msra.mxu0 0.0
    %1515 = vmatprep.subr.mxu0 0.0
    %1516 = vmatpush2.msra.mxu0 0.0
    %1517 = vmatprep.subr.mxu0 0.0
    %1518 = vmatpush2.msra.mxu0 0.0
    %1519 = vmatprep.mubr.f32.mxu0 0.0
    %1520 = vmatmul.mubr.f32.gmra.mxu0 %v1454
    %v1521 = vpop.f32.mrf.mxu0
    %v1522 = vadd.f32 0.0, %v1521
    %v1523 = vpop.f32.mrf.mxu0
    %v1524 = vadd.f32 0.0, %v1523
    %1525 = vdwg.mxu0
    %1526 = vmatprep.subr.mxu0 %v475
    %1527 = vmatpush1.msra.mxu0 %v474
    %1528 = vmatprep.subr.mxu0 %v470
    %1529 = vmatpush1.msra.mxu0 %v469
    %1530 = vmatprep.subr.mxu0 %v465
    %1531 = vmatpush1.msra.mxu0 %v464
    %1532 = vmatprep.subr.mxu0 %v460
    %1533 = vmatpush1.msra.mxu0 %v459
    %1534 = vmatprep.subr.mxu0 %v455
    %1535 = vmatpush1.msra.mxu0 %v454
    %1536 = vmatprep.subr.mxu0 %v450
    %1537 = vmatpush1.msra.mxu0 %v449
    %1538 = vmatprep.subr.mxu0 %v445
    %1539 = vmatpush1.msra.mxu0 %v444
    %1540 = vmatprep.subr.mxu0 %v440
    %1541 = vmatpush1.msra.mxu0 %v439
    %1542 = vmatprep.subr.mxu0 %v435
    %1543 = vmatpush1.msra.mxu0 %v434
    %1544 = vmatprep.subr.mxu0 %v430
    %1545 = vmatpush1.msra.mxu0 %v429
    %1546 = vmatprep.subr.mxu0 %v425
    %1547 = vmatpush1.msra.mxu0 %v424
    %1548 = vmatprep.subr.mxu0 %v420
    %1549 = vmatpush1.msra.mxu0 %v419
    %1550 = vmatprep.subr.mxu0 %v415
    %1551 = vmatpush1.msra.mxu0 %v414
    %1552 = vmatprep.subr.mxu0 %v410
    %1553 = vmatpush1.msra.mxu0 %v409
    %1554 = vmatprep.subr.mxu0 %v405
    %1555 = vmatpush1.msra.mxu0 %v404
    %1556 = vmatprep.subr.mxu0 %v400
    %1557 = vmatpush1.msra.mxu0 %v399
    %1558 = vmatprep.subr.mxu0 0.0
    %1559 = vmatpush2.msra.mxu0 0.0
    %1560 = vmatprep.subr.mxu0 0.0
    %1561 = vmatpush2.msra.mxu0 0.0
    %1562 = vmatprep.subr.mxu0 0.0
    %1563 = vmatpush2.msra.mxu0 0.0
    %1564 = vmatprep.subr.mxu0 0.0
    %1565 = vmatpush2.msra.mxu0 0.0
    %1566 = vmatprep.subr.mxu0 0.0
    %1567 = vmatpush2.msra.mxu0 0.0
    %1568 = vmatprep.subr.mxu0 0.0
    %1569 = vmatpush2.msra.mxu0 0.0
    %1570 = vmatprep.subr.mxu0 0.0
    %1571 = vmatpush2.msra.mxu0 0.0
    %1572 = vmatprep.subr.mxu0 0.0
    %1573 = vmatpush2.msra.mxu0 0.0
    %1574 = vmatprep.subr.mxu0 0.0
    %1575 = vmatpush2.msra.mxu0 0.0
    %1576 = vmatprep.subr.mxu0 0.0
    %1577 = vmatpush2.msra.mxu0 0.0
    %1578 = vmatprep.subr.mxu0 0.0
    %1579 = vmatpush2.msra.mxu0 0.0
    %1580 = vmatprep.subr.mxu0 0.0
    %1581 = vmatpush2.msra.mxu0 0.0
    %1582 = vmatprep.subr.mxu0 0.0
    %1583 = vmatpush2.msra.mxu0 0.0
    %1584 = vmatprep.subr.mxu0 0.0
    %1585 = vmatpush2.msra.mxu0 0.0
    %1586 = vmatprep.subr.mxu0 0.0
    %1587 = vmatpush2.msra.mxu0 0.0
    %1588 = vmatprep.subr.mxu0 0.0
    %1589 = vmatpush2.msra.mxu0 0.0
    %1590 = vmatprep.mubr.f32.mxu0 0.0
    %1591 = vmatmul.mubr.f32.gmra.mxu0 %v1454
    %v1592 = vpop.f32.mrf.mxu0
    %v1593 = vadd.f32 0.0, %v1592
    %v1594 = vpop.f32.mrf.mxu0
    %v1595 = vadd.f32 0.0, %v1594
    %1596 = vdwg.mxu0
    %1597 = vmatprep.subr.mxu0 0.0
    %1598 = vmatpush1.msra.mxu0 %v476
    %1599 = vmatprep.subr.mxu0 0.0
    %1600 = vmatpush1.msra.mxu0 %v471
    %1601 = vmatprep.subr.mxu0 0.0
    %1602 = vmatpush1.msra.mxu0 %v466
    %1603 = vmatprep.subr.mxu0 0.0
    %1604 = vmatpush1.msra.mxu0 %v461
    %1605 = vmatprep.subr.mxu0 0.0
    %1606 = vmatpush1.msra.mxu0 %v456
    %1607 = vmatprep.subr.mxu0 0.0
    %1608 = vmatpush1.msra.mxu0 %v451
    %1609 = vmatprep.subr.mxu0 0.0
    %1610 = vmatpush1.msra.mxu0 %v446
    %1611 = vmatprep.subr.mxu0 0.0
    %1612 = vmatpush1.msra.mxu0 %v441
    %1613 = vmatprep.subr.mxu0 0.0
    %1614 = vmatpush1.msra.mxu0 %v436
    %1615 = vmatprep.subr.mxu0 0.0
    %1616 = vmatpush1.msra.mxu0 %v431
    %1617 = vmatprep.subr.mxu0 0.0
    %1618 = vmatpush1.msra.mxu0 %v426
    %1619 = vmatprep.subr.mxu0 0.0
    %1620 = vmatpush1.msra.mxu0 %v421
    %1621 = vmatprep.subr.mxu0 0.0
    %1622 = vmatpush1.msra.mxu0 %v416
    %1623 = vmatprep.subr.mxu0 0.0
    %1624 = vmatpush1.msra.mxu0 %v411
    %1625 = vmatprep.subr.mxu0 0.0
    %1626 = vmatpush1.msra.mxu0 %v406
    %1627 = vmatprep.subr.mxu0 0.0
    %1628 = vmatpush1.msra.mxu0 %v401
    %1629 = vmatprep.subr.mxu0 0.0
    %1630 = vmatpush2.msra.mxu0 0.0
    %1631 = vmatprep.subr.mxu0 0.0
    %1632 = vmatpush2.msra.mxu0 0.0
    %1633 = vmatprep.subr.mxu0 0.0
    %1634 = vmatpush2.msra.mxu0 0.0
    %1635 = vmatprep.subr.mxu0 0.0
    %1636 = vmatpush2.msra.mxu0 0.0
    %1637 = vmatprep.subr.mxu0 0.0
    %1638 = vmatpush2.msra.mxu0 0.0
    %1639 = vmatprep.subr.mxu0 0.0
    %1640 = vmatpush2.msra.mxu0 0.0
    %1641 = vmatprep.subr.mxu0 0.0
    %1642 = vmatpush2.msra.mxu0 0.0
    %1643 = vmatprep.subr.mxu0 0.0
    %1644 = vmatpush2.msra.mxu0 0.0
    %1645 = vmatprep.subr.mxu0 0.0
    %1646 = vmatpush2.msra.mxu0 0.0
    %1647 = vmatprep.subr.mxu0 0.0
    %1648 = vmatpush2.msra.mxu0 0.0
    %1649 = vmatprep.subr.mxu0 0.0
    %1650 = vmatpush2.msra.mxu0 0.0
    %1651 = vmatprep.subr.mxu0 0.0
    %1652 = vmatpush2.msra.mxu0 0.0
    %1653 = vmatprep.subr.mxu0 0.0
    %1654 = vmatpush2.msra.mxu0 0.0
    %1655 = vmatprep.subr.mxu0 0.0
    %1656 = vmatpush2.msra.mxu0 0.0
    %1657 = vmatprep.subr.mxu0 0.0
    %1658 = vmatpush2.msra.mxu0 0.0
    %1659 = vmatprep.subr.mxu0 0.0
    %1660 = vmatpush2.msra.mxu0 0.0
    %1661 = vmatprep.mubr.f32.mxu0 0.0
    %1662 = vmatmul.mubr.f32.gmra.mxu0 %v1454
    %v1663 = vpop.f32.mrf.mxu0
    %v1664 = vadd.f32 0.0, %v1663
    %v1665 = vpop.f32.mrf.mxu0
    %1666 = vdwg.mxu0
    %1667 = vst [vmem:[%s4 + $0x20] sm:$0xff] %v1664
    %v1668 = vld [vmem:[#allocation2 + $0xa0] sm:$0xff]
    %v1669 = vld [vmem:[#allocation2 + $0xa8] sm:$0xff]
    %v1670 = vld [vmem:[#allocation2 + $0xb0] sm:$0xff]
    %v1671 = vld [vmem:[#allocation2 + $0xb8] sm:$0xff]
    %v1672 = vadd.f32 %v1668, %v1522
    %v1673 = vadd.f32 %v1669, %v1524
    %v1674 = vadd.f32 %v1670, %v1593
    %v1675 = vadd.f32 %v1671, %v1595
    %v1676 = vmul.f32 %v1672, 0.5
    %v1677 = vtanh.pop %v1676
    %v1678 = vmul.f32 %v1677, 0.5
    %v1679 = vadd.f32 %v1678, 0.5
    %v1680 = vmul.f32 %v1673, 0.5
    %v1681 = vtanh.pop %v1680
    %v1682 = vmul.f32 %v1681, 0.5
    %v1683 = vadd.f32 %v1682, 0.5
    %v1684 = vtanh.pop %v1674
    %v1685 = vmul.f32 %v1675, 0.5
    %v1686 = vtanh.pop %v1685
    %v1687 = vmul.f32 %v1686, 0.5
    %v1688 = vadd.f32 %v1687, 0.5
    %v1689 = vmul.f32 %v1683, %v1452
    %v1690 = vmul.f32 %v1679, %v1684
    %v1691 = vadd.f32 %v1689, %v1690
    %v1692 = vtanh.pop %v1691
    %v1693 = vmul.f32 %v1688, %v1692
    %1694 = vmatprep.subr.mxu0 %v473
    %1695 = vmatpush1.msra.mxu0 %v472
    %1696 = vmatprep.subr.mxu0 %v468
    %1697 = vmatpush1.msra.mxu0 %v467
    %1698 = vmatprep.subr.mxu0 %v463
    %1699 = vmatpush1.msra.mxu0 %v462
    %1700 = vmatprep.subr.mxu0 %v458
    %1701 = vmatpush1.msra.mxu0 %v457
    %1702 = vmatprep.subr.mxu0 %v453
    %1703 = vmatpush1.msra.mxu0 %v452
    %1704 = vmatprep.subr.mxu0 %v448
    %1705 = vmatpush1.msra.mxu0 %v447
    %1706 = vmatprep.subr.mxu0 %v443
    %1707 = vmatpush1.msra.mxu0 %v442
    %1708 = vmatprep.subr.mxu0 %v438
    %1709 = vmatpush1.msra.mxu0 %v437
    %1710 = vmatprep.subr.mxu0 %v433
    %1711 = vmatpush1.msra.mxu0 %v432
    %1712 = vmatprep.subr.mxu0 %v428
    %1713 = vmatpush1.msra.mxu0 %v427
    %1714 = vmatprep.subr.mxu0 %v423
    %1715 = vmatpush1.msra.mxu0 %v422
    %1716 = vmatprep.subr.mxu0 %v418
    %1717 = vmatpush1.msra.mxu0 %v417
    %1718 = vmatprep.subr.mxu0 %v413
    %1719 = vmatpush1.msra.mxu0 %v412
    %1720 = vmatprep.subr.mxu0 %v408
    %1721 = vmatpush1.msra.mxu0 %v407
    %1722 = vmatprep.subr.mxu0 %v403
    %1723 = vmatpush1.msra.mxu0 %v402
    %1724 = vmatprep.subr.mxu0 %v398
    %1725 = vmatpush1.msra.mxu0 %v397
    %1726 = vmatprep.subr.mxu0 0.0
    %1727 = vmatpush2.msra.mxu0 0.0
    %1728 = vmatprep.subr.mxu0 0.0
    %1729 = vmatpush2.msra.mxu0 0.0
    %1730 = vmatprep.subr.mxu0 0.0
    %1731 = vmatpush2.msra.mxu0 0.0
    %1732 = vmatprep.subr.mxu0 0.0
    %1733 = vmatpush2.msra.mxu0 0.0
    %1734 = vmatprep.subr.mxu0 0.0
    %1735 = vmatpush2.msra.mxu0 0.0
    %1736 = vmatprep.subr.mxu0 0.0
    %1737 = vmatpush2.msra.mxu0 0.0
    %1738 = vmatprep.subr.mxu0 0.0
    %1739 = vmatpush2.msra.mxu0 0.0
    %1740 = vmatprep.subr.mxu0 0.0
    %1741 = vmatpush2.msra.mxu0 0.0
    %1742 = vmatprep.subr.mxu0 0.0
    %1743 = vmatpush2.msra.mxu0 0.0
    %1744 = vmatprep.subr.mxu0 0.0
    %1745 = vmatpush2.msra.mxu0 0.0
    %1746 = vmatprep.subr.mxu0 0.0
    %1747 = vmatpush2.msra.mxu0 0.0
    %1748 = vmatprep.subr.mxu0 0.0
    %1749 = vmatpush2.msra.mxu0 0.0
    %1750 = vmatprep.subr.mxu0 0.0
    %1751 = vmatpush2.msra.mxu0 0.0
    %1752 = vmatprep.subr.mxu0 0.0
    %1753 = vmatpush2.msra.mxu0 0.0
    %1754 = vmatprep.subr.mxu0 0.0
    %1755 = vmatpush2.msra.mxu0 0.0
    %1756 = vmatprep.subr.mxu0 0.0
    %1757 = vmatpush2.msra.mxu0 0.0
    %1758 = vmatprep.mubr.f32.mxu0 0.0
    %1759 = vmatmul.mubr.f32.gmra.mxu0 %v1693
    %v1760 = vpop.f32.mrf.mxu0
    %v1761 = vadd.f32 0.0, %v1760
    %v1762 = vpop.f32.mrf.mxu0
    %v1763 = vadd.f32 0.0, %v1762
    %1764 = vdwg.mxu0
    %1765 = vmatprep.subr.mxu0 %v475
    %1766 = vmatpush1.msra.mxu0 %v474
    %1767 = vmatprep.subr.mxu0 %v470
    %1768 = vmatpush1.msra.mxu0 %v469
    %1769 = vmatprep.subr.mxu0 %v465
    %1770 = vmatpush1.msra.mxu0 %v464
    %1771 = vmatprep.subr.mxu0 %v460
    %1772 = vmatpush1.msra.mxu0 %v459
    %1773 = vmatprep.subr.mxu0 %v455
    %1774 = vmatpush1.msra.mxu0 %v454
    %1775 = vmatprep.subr.mxu0 %v450
    %1776 = vmatpush1.msra.mxu0 %v449
    %1777 = vmatprep.subr.mxu0 %v445
    %1778 = vmatpush1.msra.mxu0 %v444
    %1779 = vmatprep.subr.mxu0 %v440
    %1780 = vmatpush1.msra.mxu0 %v439
    %1781 = vmatprep.subr.mxu0 %v435
    %1782 = vmatpush1.msra.mxu0 %v434
    %1783 = vmatprep.subr.mxu0 %v430
    %1784 = vmatpush1.msra.mxu0 %v429
    %1785 = vmatprep.subr.mxu0 %v425
    %1786 = vmatpush1.msra.mxu0 %v424
    %1787 = vmatprep.subr.mxu0 %v420
    %1788 = vmatpush1.msra.mxu0 %v419
    %1789 = vmatprep.subr.mxu0 %v415
    %1790 = vmatpush1.msra.mxu0 %v414
    %1791 = vmatprep.subr.mxu0 %v410
    %1792 = vmatpush1.msra.mxu0 %v409
    %1793 = vmatprep.subr.mxu0 %v405
    %1794 = vmatpush1.msra.mxu0 %v404
    %1795 = vmatprep.subr.mxu0 %v400
    %1796 = vmatpush1.msra.mxu0 %v399
    %1797 = vmatprep.subr.mxu0 0.0
    %1798 = vmatpush2.msra.mxu0 0.0
    %1799 = vmatprep.subr.mxu0 0.0
    %1800 = vmatpush2.msra.mxu0 0.0
    %1801 = vmatprep.subr.mxu0 0.0
    %1802 = vmatpush2.msra.mxu0 0.0
    %1803 = vmatprep.subr.mxu0 0.0
    %1804 = vmatpush2.msra.mxu0 0.0
    %1805 = vmatprep.subr.mxu0 0.0
    %1806 = vmatpush2.msra.mxu0 0.0
    %1807 = vmatprep.subr.mxu0 0.0
    %1808 = vmatpush2.msra.mxu0 0.0
    %1809 = vmatprep.subr.mxu0 0.0
    %1810 = vmatpush2.msra.mxu0 0.0
    %1811 = vmatprep.subr.mxu0 0.0
    %1812 = vmatpush2.msra.mxu0 0.0
    %1813 = vmatprep.subr.mxu0 0.0
    %1814 = vmatpush2.msra.mxu0 0.0
    %1815 = vmatprep.subr.mxu0 0.0
    %1816 = vmatpush2.msra.mxu0 0.0
    %1817 = vmatprep.subr.mxu0 0.0
    %1818 = vmatpush2.msra.mxu0 0.0
    %1819 = vmatprep.subr.mxu0 0.0
    %1820 = vmatpush2.msra.mxu0 0.0
    %1821 = vmatprep.subr.mxu0 0.0
    %1822 = vmatpush2.msra.mxu0 0.0
    %1823 = vmatprep.subr.mxu0 0.0
    %1824 = vmatpush2.msra.mxu0 0.0
    %1825 = vmatprep.subr.mxu0 0.0
    %1826 = vmatpush2.msra.mxu0 0.0
    %1827 = vmatprep.subr.mxu0 0.0
    %1828 = vmatpush2.msra.mxu0 0.0
    %1829 = vmatprep.mubr.f32.mxu0 0.0
    %1830 = vmatmul.mubr.f32.gmra.mxu0 %v1693
    %v1831 = vpop.f32.mrf.mxu0
    %v1832 = vadd.f32 0.0, %v1831
    %v1833 = vpop.f32.mrf.mxu0
    %v1834 = vadd.f32 0.0, %v1833
    %1835 = vdwg.mxu0
    %1836 = vmatprep.subr.mxu0 0.0
    %1837 = vmatpush1.msra.mxu0 %v476
    %1838 = vmatprep.subr.mxu0 0.0
    %1839 = vmatpush1.msra.mxu0 %v471
    %1840 = vmatprep.subr.mxu0 0.0
    %1841 = vmatpush1.msra.mxu0 %v466
    %1842 = vmatprep.subr.mxu0 0.0
    %1843 = vmatpush1.msra.mxu0 %v461
    %1844 = vmatprep.subr.mxu0 0.0
    %1845 = vmatpush1.msra.mxu0 %v456
    %1846 = vmatprep.subr.mxu0 0.0
    %1847 = vmatpush1.msra.mxu0 %v451
    %1848 = vmatprep.subr.mxu0 0.0
    %1849 = vmatpush1.msra.mxu0 %v446
    %1850 = vmatprep.subr.mxu0 0.0
    %1851 = vmatpush1.msra.mxu0 %v441
    %1852 = vmatprep.subr.mxu0 0.0
    %1853 = vmatpush1.msra.mxu0 %v436
    %1854 = vmatprep.subr.mxu0 0.0
    %1855 = vmatpush1.msra.mxu0 %v431
    %1856 = vmatprep.subr.mxu0 0.0
    %1857 = vmatpush1.msra.mxu0 %v426
    %1858 = vmatprep.subr.mxu0 0.0
    %1859 = vmatpush1.msra.mxu0 %v421
    %1860 = vmatprep.subr.mxu0 0.0
    %1861 = vmatpush1.msra.mxu0 %v416
    %1862 = vmatprep.subr.mxu0 0.0
    %1863 = vmatpush1.msra.mxu0 %v411
    %1864 = vmatprep.subr.mxu0 0.0
    %1865 = vmatpush1.msra.mxu0 %v406
    %1866 = vmatprep.subr.mxu0 0.0
    %1867 = vmatpush1.msra.mxu0 %v401
    %1868 = vmatprep.subr.mxu0 0.0
    %1869 = vmatpush2.msra.mxu0 0.0
    %1870 = vmatprep.subr.mxu0 0.0
    %1871 = vmatpush2.msra.mxu0 0.0
    %1872 = vmatprep.subr.mxu0 0.0
    %1873 = vmatpush2.msra.mxu0 0.0
    %1874 = vmatprep.subr.mxu0 0.0
    %1875 = vmatpush2.msra.mxu0 0.0
    %1876 = vmatprep.subr.mxu0 0.0
    %1877 = vmatpush2.msra.mxu0 0.0
    %1878 = vmatprep.subr.mxu0 0.0
    %1879 = vmatpush2.msra.mxu0 0.0
    %1880 = vmatprep.subr.mxu0 0.0
    %1881 = vmatpush2.msra.mxu0 0.0
    %1882 = vmatprep.subr.mxu0 0.0
    %1883 = vmatpush2.msra.mxu0 0.0
    %1884 = vmatprep.subr.mxu0 0.0
    %1885 = vmatpush2.msra.mxu0 0.0
    %1886 = vmatprep.subr.mxu0 0.0
    %1887 = vmatpush2.msra.mxu0 0.0
    %1888 = vmatprep.subr.mxu0 0.0
    %1889 = vmatpush2.msra.mxu0 0.0
    %1890 = vmatprep.subr.mxu0 0.0
    %1891 = vmatpush2.msra.mxu0 0.0
    %1892 = vmatprep.subr.mxu0 0.0
    %1893 = vmatpush2.msra.mxu0 0.0
    %1894 = vmatprep.subr.mxu0 0.0
    %1895 = vmatpush2.msra.mxu0 0.0
    %1896 = vmatprep.subr.mxu0 0.0
    %1897 = vmatpush2.msra.mxu0 0.0
    %1898 = vmatprep.subr.mxu0 0.0
    %1899 = vmatpush2.msra.mxu0 0.0
    %1900 = vmatprep.mubr.f32.mxu0 0.0
    %1901 = vmatmul.mubr.f32.gmra.mxu0 %v1693
    %v1902 = vpop.f32.mrf.mxu0
    %v1903 = vadd.f32 0.0, %v1902
    %v1904 = vpop.f32.mrf.mxu0
    %1905 = vdwg.mxu0
    %1906 = vst [vmem:[%s4 + $0x28] sm:$0xff] %v1903
    %v1907 = vld [vmem:[#allocation2 + $0xc0] sm:$0xff]
    %v1908 = vld [vmem:[#allocation2 + $0xc8] sm:$0xff]
    %v1909 = vld [vmem:[#allocation2 + $0xd0] sm:$0xff]
    %v1910 = vld [vmem:[#allocation2 + $0xd8] sm:$0xff]
    %v1911 = vadd.f32 %v1907, %v1761
    %v1912 = vadd.f32 %v1908, %v1763
    %v1913 = vadd.f32 %v1909, %v1832
    %v1914 = vadd.f32 %v1910, %v1834
    %v1915 = vmul.f32 %v1911, 0.5
    %v1916 = vtanh.pop %v1915
    %v1917 = vmul.f32 %v1916, 0.5
    %v1918 = vadd.f32 %v1917, 0.5
    %v1919 = vmul.f32 %v1912, 0.5
    %v1920 = vtanh.pop %v1919
    %v1921 = vmul.f32 %v1920, 0.5
    %v1922 = vadd.f32 %v1921, 0.5
    %v1923 = vtanh.pop %v1913
    %v1924 = vmul.f32 %v1914, 0.5
    %v1925 = vtanh.pop %v1924
    %v1926 = vmul.f32 %v1925, 0.5
    %v1927 = vadd.f32 %v1926, 0.5
    %v1928 = vmul.f32 %v1922, %v1691
    %v1929 = vmul.f32 %v1918, %v1923
    %v1930 = vadd.f32 %v1928, %v1929
    %v1931 = vtanh.pop %v1930
    %v1932 = vmul.f32 %v1927, %v1931
    %1933 = vmatprep.subr.mxu0 %v473
    %1934 = vmatpush1.msra.mxu0 %v472
    %1935 = vmatprep.subr.mxu0 %v468
    %1936 = vmatpush1.msra.mxu0 %v467
    %1937 = vmatprep.subr.mxu0 %v463
    %1938 = vmatpush1.msra.mxu0 %v462
    %1939 = vmatprep.subr.mxu0 %v458
    %1940 = vmatpush1.msra.mxu0 %v457
    %1941 = vmatprep.subr.mxu0 %v453
    %1942 = vmatpush1.msra.mxu0 %v452
    %1943 = vmatprep.subr.mxu0 %v448
    %1944 = vmatpush1.msra.mxu0 %v447
    %1945 = vmatprep.subr.mxu0 %v443
    %1946 = vmatpush1.msra.mxu0 %v442
    %1947 = vmatprep.subr.mxu0 %v438
    %1948 = vmatpush1.msra.mxu0 %v437
    %1949 = vmatprep.subr.mxu0 %v433
    %1950 = vmatpush1.msra.mxu0 %v432
    %1951 = vmatprep.subr.mxu0 %v428
    %1952 = vmatpush1.msra.mxu0 %v427
    %1953 = vmatprep.subr.mxu0 %v423
    %1954 = vmatpush1.msra.mxu0 %v422
    %1955 = vmatprep.subr.mxu0 %v418
    %1956 = vmatpush1.msra.mxu0 %v417
    %1957 = vmatprep.subr.mxu0 %v413
    %1958 = vmatpush1.msra.mxu0 %v412
    %1959 = vmatprep.subr.mxu0 %v408
    %1960 = vmatpush1.msra.mxu0 %v407
    %1961 = vmatprep.subr.mxu0 %v403
    %1962 = vmatpush1.msra.mxu0 %v402
    %1963 = vmatprep.subr.mxu0 %v398
    %1964 = vmatpush1.msra.mxu0 %v397
    %1965 = vmatprep.subr.mxu0 0.0
    %1966 = vmatpush2.msra.mxu0 0.0
    %1967 = vmatprep.subr.mxu0 0.0
    %1968 = vmatpush2.msra.mxu0 0.0
    %1969 = vmatprep.subr.mxu0 0.0
    %1970 = vmatpush2.msra.mxu0 0.0
    %1971 = vmatprep.subr.mxu0 0.0
    %1972 = vmatpush2.msra.mxu0 0.0
    %1973 = vmatprep.subr.mxu0 0.0
    %1974 = vmatpush2.msra.mxu0 0.0
    %1975 = vmatprep.subr.mxu0 0.0
    %1976 = vmatpush2.msra.mxu0 0.0
    %1977 = vmatprep.subr.mxu0 0.0
    %1978 = vmatpush2.msra.mxu0 0.0
    %1979 = vmatprep.subr.mxu0 0.0
    %1980 = vmatpush2.msra.mxu0 0.0
    %1981 = vmatprep.subr.mxu0 0.0
    %1982 = vmatpush2.msra.mxu0 0.0
    %1983 = vmatprep.subr.mxu0 0.0
    %1984 = vmatpush2.msra.mxu0 0.0
    %1985 = vmatprep.subr.mxu0 0.0
    %1986 = vmatpush2.msra.mxu0 0.0
    %1987 = vmatprep.subr.mxu0 0.0
    %1988 = vmatpush2.msra.mxu0 0.0
    %1989 = vmatprep.subr.mxu0 0.0
    %1990 = vmatpush2.msra.mxu0 0.0
    %1991 = vmatprep.subr.mxu0 0.0
    %1992 = vmatpush2.msra.mxu0 0.0
    %1993 = vmatprep.subr.mxu0 0.0
    %1994 = vmatpush2.msra.mxu0 0.0
    %1995 = vmatprep.subr.mxu0 0.0
    %1996 = vmatpush2.msra.mxu0 0.0
    %1997 = vmatprep.mubr.f32.mxu0 0.0
    %1998 = vmatmul.mubr.f32.gmra.mxu0 %v1932
    %v1999 = vpop.f32.mrf.mxu0
    %v2000 = vadd.f32 0.0, %v1999
    %v2001 = vpop.f32.mrf.mxu0
    %v2002 = vadd.f32 0.0, %v2001
    %2003 = vdwg.mxu0
    %2004 = vmatprep.subr.mxu0 %v475
    %2005 = vmatpush1.msra.mxu0 %v474
    %2006 = vmatprep.subr.mxu0 %v470
    %2007 = vmatpush1.msra.mxu0 %v469
    %2008 = vmatprep.subr.mxu0 %v465
    %2009 = vmatpush1.msra.mxu0 %v464
    %2010 = vmatprep.subr.mxu0 %v460
    %2011 = vmatpush1.msra.mxu0 %v459
    %2012 = vmatprep.subr.mxu0 %v455
    %2013 = vmatpush1.msra.mxu0 %v454
    %2014 = vmatprep.subr.mxu0 %v450
    %2015 = vmatpush1.msra.mxu0 %v449
    %2016 = vmatprep.subr.mxu0 %v445
    %2017 = vmatpush1.msra.mxu0 %v444
    %2018 = vmatprep.subr.mxu0 %v440
    %2019 = vmatpush1.msra.mxu0 %v439
    %2020 = vmatprep.subr.mxu0 %v435
    %2021 = vmatpush1.msra.mxu0 %v434
    %2022 = vmatprep.subr.mxu0 %v430
    %2023 = vmatpush1.msra.mxu0 %v429
    %2024 = vmatprep.subr.mxu0 %v425
    %2025 = vmatpush1.msra.mxu0 %v424
    %2026 = vmatprep.subr.mxu0 %v420
    %2027 = vmatpush1.msra.mxu0 %v419
    %2028 = vmatprep.subr.mxu0 %v415
    %2029 = vmatpush1.msra.mxu0 %v414
    %2030 = vmatprep.subr.mxu0 %v410
    %2031 = vmatpush1.msra.mxu0 %v409
    %2032 = vmatprep.subr.mxu0 %v405
    %2033 = vmatpush1.msra.mxu0 %v404
    %2034 = vmatprep.subr.mxu0 %v400
    %2035 = vmatpush1.msra.mxu0 %v399
    %2036 = vmatprep.subr.mxu0 0.0
    %2037 = vmatpush2.msra.mxu0 0.0
    %2038 = vmatprep.subr.mxu0 0.0
    %2039 = vmatpush2.msra.mxu0 0.0
    %2040 = vmatprep.subr.mxu0 0.0
    %2041 = vmatpush2.msra.mxu0 0.0
    %2042 = vmatprep.subr.mxu0 0.0
    %2043 = vmatpush2.msra.mxu0 0.0
    %2044 = vmatprep.subr.mxu0 0.0
    %2045 = vmatpush2.msra.mxu0 0.0
    %2046 = vmatprep.subr.mxu0 0.0
    %2047 = vmatpush2.msra.mxu0 0.0
    %2048 = vmatprep.subr.mxu0 0.0
    %2049 = vmatpush2.msra.mxu0 0.0
    %2050 = vmatprep.subr.mxu0 0.0
    %2051 = vmatpush2.msra.mxu0 0.0
    %2052 = vmatprep.subr.mxu0 0.0
    %2053 = vmatpush2.msra.mxu0 0.0
    %2054 = vmatprep.subr.mxu0 0.0
    %2055 = vmatpush2.msra.mxu0 0.0
    %2056 = vmatprep.subr.mxu0 0.0
    %2057 = vmatpush2.msra.mxu0 0.0
    %2058 = vmatprep.subr.mxu0 0.0
    %2059 = vmatpush2.msra.mxu0 0.0
    %2060 = vmatprep.subr.mxu0 0.0
    %2061 = vmatpush2.msra.mxu0 0.0
    %2062 = vmatprep.subr.mxu0 0.0
    %2063 = vmatpush2.msra.mxu0 0.0
    %2064 = vmatprep.subr.mxu0 0.0
    %2065 = vmatpush2.msra.mxu0 0.0
    %2066 = vmatprep.subr.mxu0 0.0
    %2067 = vmatpush2.msra.mxu0 0.0
    %2068 = vmatprep.mubr.f32.mxu0 0.0
    %2069 = vmatmul.mubr.f32.gmra.mxu0 %v1932
    %v2070 = vpop.f32.mrf.mxu0
    %v2071 = vadd.f32 0.0, %v2070
    %v2072 = vpop.f32.mrf.mxu0
    %v2073 = vadd.f32 0.0, %v2072
    %2074 = vdwg.mxu0
    %2075 = vmatprep.subr.mxu0 0.0
    %2076 = vmatpush1.msra.mxu0 %v476
    %2077 = vmatprep.subr.mxu0 0.0
    %2078 = vmatpush1.msra.mxu0 %v471
    %2079 = vmatprep.subr.mxu0 0.0
    %2080 = vmatpush1.msra.mxu0 %v466
    %2081 = vmatprep.subr.mxu0 0.0
    %2082 = vmatpush1.msra.mxu0 %v461
    %2083 = vmatprep.subr.mxu0 0.0
    %2084 = vmatpush1.msra.mxu0 %v456
    %2085 = vmatprep.subr.mxu0 0.0
    %2086 = vmatpush1.msra.mxu0 %v451
    %2087 = vmatprep.subr.mxu0 0.0
    %2088 = vmatpush1.msra.mxu0 %v446
    %2089 = vmatprep.subr.mxu0 0.0
    %2090 = vmatpush1.msra.mxu0 %v441
    %2091 = vmatprep.subr.mxu0 0.0
    %2092 = vmatpush1.msra.mxu0 %v436
    %2093 = vmatprep.subr.mxu0 0.0
    %2094 = vmatpush1.msra.mxu0 %v431
    %2095 = vmatprep.subr.mxu0 0.0
    %2096 = vmatpush1.msra.mxu0 %v426
    %2097 = vmatprep.subr.mxu0 0.0
    %2098 = vmatpush1.msra.mxu0 %v421
    %2099 = vmatprep.subr.mxu0 0.0
    %2100 = vmatpush1.msra.mxu0 %v416
    %2101 = vmatprep.subr.mxu0 0.0
    %2102 = vmatpush1.msra.mxu0 %v411
    %2103 = vmatprep.subr.mxu0 0.0
    %2104 = vmatpush1.msra.mxu0 %v406
    %2105 = vmatprep.subr.mxu0 0.0
    %2106 = vmatpush1.msra.mxu0 %v401
    %2107 = vmatprep.subr.mxu0 0.0
    %2108 = vmatpush2.msra.mxu0 0.0
    %2109 = vmatprep.subr.mxu0 0.0
    %2110 = vmatpush2.msra.mxu0 0.0
    %2111 = vmatprep.subr.mxu0 0.0
    %2112 = vmatpush2.msra.mxu0 0.0
    %2113 = vmatprep.subr.mxu0 0.0
    %2114 = vmatpush2.msra.mxu0 0.0
    %2115 = vmatprep.subr.mxu0 0.0
    %2116 = vmatpush2.msra.mxu0 0.0
    %2117 = vmatprep.subr.mxu0 0.0
    %2118 = vmatpush2.msra.mxu0 0.0
    %2119 = vmatprep.subr.mxu0 0.0
    %2120 = vmatpush2.msra.mxu0 0.0
    %2121 = vmatprep.subr.mxu0 0.0
    %2122 = vmatpush2.msra.mxu0 0.0
    %2123 = vmatprep.subr.mxu0 0.0
    %2124 = vmatpush2.msra.mxu0 0.0
    %2125 = vmatprep.subr.mxu0 0.0
    %2126 = vmatpush2.msra.mxu0 0.0
    %2127 = vmatprep.subr.mxu0 0.0
    %2128 = vmatpush2.msra.mxu0 0.0
    %2129 = vmatprep.subr.mxu0 0.0
    %2130 = vmatpush2.msra.mxu0 0.0
    %2131 = vmatprep.subr.mxu0 0.0
    %2132 = vmatpush2.msra.mxu0 0.0
    %2133 = vmatprep.subr.mxu0 0.0
    %2134 = vmatpush2.msra.mxu0 0.0
    %2135 = vmatprep.subr.mxu0 0.0
    %2136 = vmatpush2.msra.mxu0 0.0
    %2137 = vmatprep.subr.mxu0 0.0
    %2138 = vmatpush2.msra.mxu0 0.0
    %2139 = vmatprep.mubr.f32.mxu0 0.0
    %2140 = vmatmul.mubr.f32.gmra.mxu0 %v1932
    %v2141 = vpop.f32.mrf.mxu0
    %v2142 = vadd.f32 0.0, %v2141
    %v2143 = vpop.f32.mrf.mxu0
    %2144 = vdwg.mxu0
    %2145 = vst [vmem:[%s4 + $0x30] sm:$0xff] %v2142
    %v2146 = vld [vmem:[#allocation2 + $0xe0] sm:$0xff]
    %v2147 = vld [vmem:[#allocation2 + $0xe8] sm:$0xff]
    %v2148 = vld [vmem:[#allocation2 + $0xf0] sm:$0xff]
    %v2149 = vld [vmem:[#allocation2 + $0xf8] sm:$0xff]
    %v2150 = vadd.f32 %v2146, %v2000
    %v2151 = vadd.f32 %v2147, %v2002
    %v2152 = vadd.f32 %v2148, %v2071
    %v2153 = vadd.f32 %v2149, %v2073
    %v2154 = vmul.f32 %v2150, 0.5
    %v2155 = vtanh.pop %v2154
    %v2156 = vmul.f32 %v2155, 0.5
    %v2157 = vadd.f32 %v2156, 0.5
    %v2158 = vmul.f32 %v2151, 0.5
    %v2159 = vtanh.pop %v2158
    %v2160 = vmul.f32 %v2159, 0.5
    %v2161 = vadd.f32 %v2160, 0.5
    %v2162 = vtanh.pop %v2152
    %v2163 = vmul.f32 %v2153, 0.5
    %v2164 = vtanh.pop %v2163
    %v2165 = vmul.f32 %v2164, 0.5
    %v2166 = vadd.f32 %v2165, 0.5
    %v2167 = vmul.f32 %v2161, %v1930
    %v2168 = vmul.f32 %v2157, %v2162
    %v2169 = vadd.f32 %v2167, %v2168
    %v2170 = vtanh.pop %v2169
    %v2171 = vmul.f32 %v2166, %v2170
    %2172 = vmatprep.subr.mxu0 0.0
    %2173 = vmatpush1.msra.mxu0 %v476
    %2174 = vmatprep.subr.mxu0 0.0
    %2175 = vmatpush1.msra.mxu0 %v471
    %2176 = vmatprep.subr.mxu0 0.0
    %2177 = vmatpush1.msra.mxu0 %v466
    %2178 = vmatprep.subr.mxu0 0.0
    %2179 = vmatpush1.msra.mxu0 %v461
    %2180 = vmatprep.subr.mxu0 0.0
    %2181 = vmatpush1.msra.mxu0 %v456
    %2182 = vmatprep.subr.mxu0 0.0
    %2183 = vmatpush1.msra.mxu0 %v451
    %2184 = vmatprep.subr.mxu0 0.0
    %2185 = vmatpush1.msra.mxu0 %v446
    %2186 = vmatprep.subr.mxu0 0.0
    %2187 = vmatpush1.msra.mxu0 %v441
    %2188 = vmatprep.subr.mxu0 0.0
    %2189 = vmatpush1.msra.mxu0 %v436
    %2190 = vmatprep.subr.mxu0 0.0
    %2191 = vmatpush1.msra.mxu0 %v431
    %2192 = vmatprep.subr.mxu0 0.0
    %2193 = vmatpush1.msra.mxu0 %v426
    %2194 = vmatprep.subr.mxu0 0.0
    %2195 = vmatpush1.msra.mxu0 %v421
    %2196 = vmatprep.subr.mxu0 0.0
    %2197 = vmatpush1.msra.mxu0 %v416
    %2198 = vmatprep.subr.mxu0 0.0
    %2199 = vmatpush1.msra.mxu0 %v411
    %2200 = vmatprep.subr.mxu0 0.0
    %2201 = vmatpush1.msra.mxu0 %v406
    %2202 = vmatprep.subr.mxu0 0.0
    %2203 = vmatpush1.msra.mxu0 %v401
    %2204 = vmatprep.subr.mxu0 0.0
    %2205 = vmatpush2.msra.mxu0 0.0
    %2206 = vmatprep.subr.mxu0 0.0
    %2207 = vmatpush2.msra.mxu0 0.0
    %2208 = vmatprep.subr.mxu0 0.0
    %2209 = vmatpush2.msra.mxu0 0.0
    %2210 = vmatprep.subr.mxu0 0.0
    %2211 = vmatpush2.msra.mxu0 0.0
    %2212 = vmatprep.subr.mxu0 0.0
    %2213 = vmatpush2.msra.mxu0 0.0
    %2214 = vmatprep.subr.mxu0 0.0
    %2215 = vmatpush2.msra.mxu0 0.0
    %2216 = vmatprep.subr.mxu0 0.0
    %2217 = vmatpush2.msra.mxu0 0.0
    %2218 = vmatprep.subr.mxu0 0.0
    %2219 = vmatpush2.msra.mxu0 0.0
    %2220 = vmatprep.subr.mxu0 0.0
    %2221 = vmatpush2.msra.mxu0 0.0
    %2222 = vmatprep.subr.mxu0 0.0
    %2223 = vmatpush2.msra.mxu0 0.0
    %2224 = vmatprep.subr.mxu0 0.0
    %2225 = vmatpush2.msra.mxu0 0.0
    %2226 = vmatprep.subr.mxu0 0.0
    %2227 = vmatpush2.msra.mxu0 0.0
    %2228 = vmatprep.subr.mxu0 0.0
    %2229 = vmatpush2.msra.mxu0 0.0
    %2230 = vmatprep.subr.mxu0 0.0
    %2231 = vmatpush2.msra.mxu0 0.0
    %2232 = vmatprep.subr.mxu0 0.0
    %2233 = vmatpush2.msra.mxu0 0.0
    %2234 = vmatprep.subr.mxu0 0.0
    %2235 = vmatpush2.msra.mxu0 0.0
    %2236 = vmatprep.mubr.f32.mxu0 0.0
    %2237 = vmatmul.mubr.f32.gmra.mxu0 %v2171
    %v2238 = vpop.f32.mrf.mxu0
    %v2239 = vadd.f32 0.0, %v2238
    %v2240 = vpop.f32.mrf.mxu0
    %2241 = vdwg.mxu0
    %2242 = vst [vmem:[%s4 + $0x38] sm:$0xff] %v2239
    // Predicated region
    $region26: #{net_forward.1} parent=1 // pred_check
      _
    $region27: #{net_forward.1} parent=1 // pred_check_branch
      %2244 = sbr.rel (0) target = $region29
    $region28: #{net_forward.1} parent=1 // pred_region
      _
    $region29: #{net_forward.1} parent=1 // pred_fallthru
      _
    // Predicated region
    $region30: #{net_forward.1} parent=1 // pred_check
      _
    $region31: #{net_forward.1} parent=1 // pred_check_branch
      %2246 = sbr.rel (0) target = $region33
    $region32: #{net_forward.1} parent=1 // pred_region
      _
    $region33: #{net_forward.1} parent=1 // pred_fallthru
      _
    %2247 = vsyncpa [#allocation4], 1
    %2248 = vsyncpa [#allocation6], 1

</llo_original>
